<compile_context>
chip_gen: v7x
topology: tpu7x:2x2x1
jax: 0.10.0
libtpu: 0.0.40
codegen_flags: <defaults>
</compile_context>

<pallas_src>
import functools

import jax
import jax.numpy as jnp
from jax import lax
from jax.experimental import pallas as pl
from jax.experimental.pallas import tpu as pltpu

_LANE = 128      # vreg lane width
_SUBLANE = 8     # f32 sublane height


def _round_up(x, m):
    return (x + m - 1) // m * m


def _cdiv(a, b):
    return (a + b - 1) // b


# ---------------------------------------------------------------------------
# Backbone kernel: Conv3x3(pad=1) + bias + ReLU + global-average-pool.
# One batch element per grid step; spatial strips are looped in-kernel over
# the VMEM-resident flattened padded image.
# ---------------------------------------------------------------------------
def _backbone_kernel(xcol_ref, mask_ref, wconv_ref, bconv_ref, v_ref, *,
                     offsets, m, n_strips, k, k_pad, inv_hw):
    """
    xcol_ref : (L, Cin)          f32  flattened spatially-padded image (+halo)
    mask_ref : (P_round, 1)      f32  1.0 on the H*W interior positions
    wconv_ref: (K_pad, Cout_pad) bf16 flattened 3x3 conv weight (K = 9*Cin)
    bconv_ref: (1, Cout_pad)     f32  conv bias
    v_ref    : (8, Cout_pad)     f32  GAP feature, replicated over 8 sublanes
    """
    cout_p = v_ref.shape[-1]

    def strip_partial(p0):
        # The 9 taps are plain sublane-offset slices of the flattened image:
        # no reshapes across tiled dims, no HBM duplication.
        taps = [xcol_ref[pl.ds(p0 + off, m), :] for off in offsets]
        if k_pad > k:                       # lane-pad K -> dense cols slab
            taps.append(jnp.zeros((m, k_pad - k), jnp.float32))
        cols = jnp.concatenate(taps, axis=-1).astype(jnp.bfloat16)   # (m, K_pad)
        conv = jnp.dot(cols, wconv_ref[...],                          # one MXU matmul
                       preferred_element_type=jnp.float32)            # (m, Cout_pad)
        conv = jnp.maximum(conv + bconv_ref[...], 0.0)                 # bias + ReLU (f32 VPU)
        conv = conv * mask_ref[pl.ds(p0, m), :]                        # zero junk positions
        # Partial GAP: fold vreg-rows with VPU adds only; defer the
        # cross-sublane (XLU) collapse to the single finalize below.
        return conv.reshape(m // _SUBLANE, _SUBLANE, cout_p).sum(axis=0)

    if n_strips == 1:
        acc = strip_partial(0)
    else:
        def body(s, acc):
            return acc + strip_partial(pl.multiple_of(s * m, _SUBLANE))
        acc = lax.fori_loop(0, n_strips, body,
                            jnp.zeros((_SUBLANE, cout_p), jnp.float32))

    v = acc.sum(axis=0, keepdims=True) * inv_hw                        # (1, Cout_pad)
    v_ref[...] = jnp.broadcast_to(v, v_ref.shape).astype(v_ref.dtype)


# ---------------------------------------------------------------------------
# Classifier head: one batched (B, Cout_pad) x (Cout_pad, NC_pad) MXU matmul.
# ---------------------------------------------------------------------------
def _classifier_kernel(v_ref, wcls_ref, bcls_ref, y_ref):
    y = jnp.dot(v_ref[...].astype(jnp.bfloat16), wcls_ref[...],
                preferred_element_type=jnp.float32) + bcls_ref[...]
    y_ref[...] = y.astype(y_ref.dtype)


# ---------------------------------------------------------------------------
# Wrapper (mirrors TorchVisionModel.forward semantics)
# ---------------------------------------------------------------------------
def tv_model_forward(x_nchw, params, *, training=True,
                     loss=frozenset({'xent', 'htri'}), strip_positions=512):
    wconv, bconv, wcls, bcls = params
    B, Cin, H, W = x_nchw.shape
    KH, KW, _, Cout = wconv.shape
    assert (KH, KW) == (3, 3), "stand-in backbone uses a 3x3 conv"
    num_classes = wcls.shape[-1]

    Wp = W + 2                               # padded row width
    P = (H + 2) * Wp                         # flattened padded positions
    K = KH * KW * Cin
    K_pad = _round_up(K, _LANE)
    Cout_pad = _round_up(Cout, _LANE)
    NC_pad = _round_up(num_classes, _LANE)

    # Strip sizing: M positions per MXU matmul, multiple of 8, target ~512,
    # never collapsing into an oversized single tile for big images.
    if P <= strip_positions:
        M = _round_up(P, _SUBLANE)
        n_strips = 1
    else:
        M = _round_up(strip_positions, _SUBLANE)
        n_strips = _cdiv(P, M)
    P_round = n_strips * M
    front = Wp + 1                           # |most negative tap offset|
    L = P_round + 2 * Wp + 2                 # covers the largest tap offset

    # ---- wrapper glue: ~1x-sized slab (transpose + pad + flatten only). ----
    x_nhwc = jnp.transpose(x_nchw, (0, 2, 3, 1)).astype(jnp.float32)
    x_sp = jnp.pad(x_nhwc, ((0, 0), (1, 1), (1, 1), (0, 0)))     # (B, H+2, W+2, Cin)
    flat = x_sp.reshape(B, P, Cin)
    xcol = jnp.pad(flat, ((0, 0), (front, L - front - P), (0, 0)))   # (B, L, Cin)

    # Validity mask over flattened padded positions (1 on the H x W interior;
    # 0 on pad rows/cols, row-wrap junk, and the rounded-up tail).
    pos = jnp.arange(P_round, dtype=jnp.int32)
    colp = pos % Wp
    valid = (pos >= Wp) & (pos < (H + 1) * Wp) & (colp >= 1) & (colp <= W)
    mask = valid.astype(jnp.float32).reshape(P_round, 1)

    # Conv weight flattened to (K, Cout), zero-padded to (K_pad, Cout_pad).
    w2d = jnp.pad(wconv.reshape(K, Cout),
                  ((0, K_pad - K), (0, Cout_pad - Cout))).astype(jnp.bfloat16)
    bconv_p = jnp.pad(bconv.reshape(1, Cout),
                      ((0, 0), (0, Cout_pad - Cout))).astype(jnp.float32)

    # tap(kh,kw)[p] = xcol[p + kh*(W+2) + kw]  (after the `front` halo pad).
    offs = tuple(kh * Wp + kw for kh in range(3) for kw in range(3))

    v_pad8 = pl.pallas_call(
        functools.partial(_backbone_kernel, offsets=offs, m=M,
                          n_strips=n_strips, k=K, k_pad=K_pad,
                          inv_hw=1.0 / float(H * W)),
        out_shape=jax.ShapeDtypeStruct((B, _SUBLANE, Cout_pad), jnp.float32),
        grid=(B,),
        in_specs=[
            pl.BlockSpec((None, L, Cin), lambda b: (b, 0, 0)),
            pl.BlockSpec((P_round, 1), lambda b: (0, 0)),
            pl.BlockSpec((K_pad, Cout_pad), lambda b: (0, 0)),
            pl.BlockSpec((1, Cout_pad), lambda b: (0, 0)),
        ],
        out_specs=pl.BlockSpec((None, _SUBLANE, Cout_pad), lambda b: (b, 0, 0)),
        compiler_params=pltpu.CompilerParams(
            dimension_semantics=("parallel",),          # batch across v7x cores
            vmem_limit_bytes=48 * 1024 * 1024,           # < v7x 64 MiB budget
        ),
    )(xcol, mask, w2d, bconv_p)

    v_full = v_pad8[:, 0, :]                 # (B, Cout_pad) f32
    v = v_full[:, :Cout]

    if not training:
        return v

    wcls_p = jnp.pad(wcls, ((0, Cout_pad - Cout),
                            (0, NC_pad - num_classes))).astype(jnp.bfloat16)
    bcls_p = jnp.pad(bcls.reshape(1, num_classes),
                     ((0, 0), (0, NC_pad - num_classes))).astype(jnp.float32)

    y_pad = pl.pallas_call(
        _classifier_kernel,
        out_shape=jax.ShapeDtypeStruct((B, NC_pad), jnp.float32),
        grid=(1,),
        in_specs=[
            pl.BlockSpec((B, Cout_pad), lambda i: (0, 0)),
            pl.BlockSpec((Cout_pad, NC_pad), lambda i: (0, 0)),
            pl.BlockSpec((1, NC_pad), lambda i: (0, 0)),
        ],
        out_specs=pl.BlockSpec((B, NC_pad), lambda i: (0, 0)),
        compiler_params=pltpu.CompilerParams(
            dimension_semantics=("arbitrary",)),
    )(v_full, wcls_p, bcls_p)
    y = y_pad[:, :num_classes]

    loss = frozenset(loss)
    if loss == frozenset({'xent'}):
        return y
    elif loss == frozenset({'xent', 'htri'}):
        return (y, v)
    else:
        raise KeyError(f'Unsupported loss: {loss}')


# ---------------------------------------------------------------------------
# Pure-JAX f32 reference (sanity check) and param init
# ---------------------------------------------------------------------------
def _reference_forward(x_nchw, params):
    wconv, bconv, wcls, bcls = params
    x = jnp.transpose(x_nchw, (0, 2, 3, 1))
    conv = lax.conv_general_dilated(
        x, wconv, window_strides=(1, 1), padding='SAME',
        dimension_numbers=('NHWC', 'HWIO', 'NHWC'))
    conv = jnp.maximum(conv + bconv.reshape(1, 1, 1, -1), 0.0)
    v = jnp.mean(conv, axis=(1, 2))
    y = v @ wcls + bcls.reshape(1, -1)
    return y, v


def init_params(key, cin, feature_dim, num_classes):
    k1, k2, k3, k4 = jax.random.split(key, 4)
    wconv = 0.1 * jax.random.normal(k1, (3, 3, cin, feature_dim), jnp.float32)
    bconv = 0.1 * jax.random.normal(k2, (1, feature_dim), jnp.float32)
    # torch Linear stores (num_classes, feature_dim); kept pre-transposed here.
    wcls = 0.1 * jax.random.normal(k3, (feature_dim, num_classes), jnp.float32)
    bcls = 0.1 * jax.random.normal(k4, (1, num_classes), jnp.float32)
    return wconv, bconv, wcls, bcls


if __name__ == "__main__":
    B, Cin, H, W = 2, 4, 16, 16
    feature_dim, num_classes = 32, 8

    key = jax.random.PRNGKey(0)
    kx, kp = jax.random.split(key)
    x = jax.random.normal(kx, (B, Cin, H, W), jnp.float32)
    params = init_params(kp, Cin, feature_dim, num_classes)

    # train, loss={'xent','htri'} -> (y, v)
    fwd = jax.jit(functools.partial(tv_model_forward, training=True,
                                    loss=frozenset({'xent', 'htri'})))
    y, v = fwd(x, params)
    jax.block_until_ready((y, v))
    assert y.shape == (B, num_classes) and v.shape == (B, feature_dim)

    # Loose sanity check vs. f32 reference (bf16 MXU feed -> generous tol).
    y_exp, v_exp = _reference_forward(x, params)
    assert jnp.allclose(v, v_exp, rtol=5e-2, atol=5e-2), "feature mismatch"
    assert jnp.allclose(y, y_exp, rtol=5e-2, atol=5e-2), "logit mismatch"

    # train, loss={'xent'} -> logits only
    y_only = tv_model_forward(x, params, training=True,
                              loss=frozenset({'xent'}))
    jax.block_until_ready(y_only)
    assert y_only.shape == (B, num_classes)

    # eval mode (self.training == False) -> features only (no classifier).
    v_eval = tv_model_forward(x, params, training=False)
    jax.block_until_ready(v_eval)
    assert v_eval.shape == (B, feature_dim)
    assert jnp.allclose(v_eval, v_exp, rtol=5e-2, atol=5e-2)

    print("KERNEL_OK")
</pallas_src>

<mosaic_0001>
module attributes {stable_mosaic.version = 11 : i64} {
  func.func @_backbone_kernel(%arg0: i32, %arg1: memref<1x366x4xf32, #tpu.memory_space<vmem>>, %arg2: memref<328x1xf32, #tpu.memory_space<vmem>>, %arg3: memref<128x128xbf16, #tpu.memory_space<vmem>>, %arg4: memref<1x128xf32, #tpu.memory_space<vmem>>, %arg5: memref<1x8x128xf32, #tpu.memory_space<vmem>>) attributes {dimension_semantics = [#tpu.dimension_semantics<parallel>], iteration_bounds = array<i64: 2>, scalar_prefetch = 0 : i64, scratch_operands = 0 : i64, tpu.core_type = #tpu.core_type<tc>, window_params = [{transform_indices = @transform_0, window_bounds = array<i64: 1, 366, 4>}, {pipeline_mode = #tpu.pipeline_mode<synchronous>, transform_indices = @transform_1, window_bounds = array<i64: 328, 1>}, {pipeline_mode = #tpu.pipeline_mode<synchronous>, transform_indices = @transform_2, window_bounds = array<i64: 128, 128>}, {pipeline_mode = #tpu.pipeline_mode<synchronous>, transform_indices = @transform_3, window_bounds = array<i64: 1, 128>}, {transform_indices = @transform_4, window_bounds = array<i64: 1, 8, 128>}]} {
    %c0 = arith.constant 0 : index
    %c0_0 = arith.constant 0 : index
    %c0_1 = arith.constant 0 : index
    %0 = vector.load %arg1[%c0, %c0_0, %c0_1] : memref<1x366x4xf32, #tpu.memory_space<vmem>>, vector<1x328x4xf32>
    %1 = vector.shape_cast %0 : vector<1x328x4xf32> to vector<328x4xf32>
    %c0_2 = arith.constant 0 : index
    %c1 = arith.constant 1 : index
    %c0_3 = arith.constant 0 : index
    %2 = vector.load %arg1[%c0_2, %c1, %c0_3] : memref<1x366x4xf32, #tpu.memory_space<vmem>>, vector<1x328x4xf32>
    %3 = vector.shape_cast %2 : vector<1x328x4xf32> to vector<328x4xf32>
    %c0_4 = arith.constant 0 : index
    %c2 = arith.constant 2 : index
    %c0_5 = arith.constant 0 : index
    %4 = vector.load %arg1[%c0_4, %c2, %c0_5] : memref<1x366x4xf32, #tpu.memory_space<vmem>>, vector<1x328x4xf32>
    %5 = vector.shape_cast %4 : vector<1x328x4xf32> to vector<328x4xf32>
    %c0_6 = arith.constant 0 : index
    %c18 = arith.constant 18 : index
    %c0_7 = arith.constant 0 : index
    %6 = vector.load %arg1[%c0_6, %c18, %c0_7] : memref<1x366x4xf32, #tpu.memory_space<vmem>>, vector<1x328x4xf32>
    %7 = vector.shape_cast %6 : vector<1x328x4xf32> to vector<328x4xf32>
    %c0_8 = arith.constant 0 : index
    %c19 = arith.constant 19 : index
    %c0_9 = arith.constant 0 : index
    %8 = vector.load %arg1[%c0_8, %c19, %c0_9] : memref<1x366x4xf32, #tpu.memory_space<vmem>>, vector<1x328x4xf32>
    %9 = vector.shape_cast %8 : vector<1x328x4xf32> to vector<328x4xf32>
    %c0_10 = arith.constant 0 : index
    %c20 = arith.constant 20 : index
    %c0_11 = arith.constant 0 : index
    %10 = vector.load %arg1[%c0_10, %c20, %c0_11] : memref<1x366x4xf32, #tpu.memory_space<vmem>>, vector<1x328x4xf32>
    %11 = vector.shape_cast %10 : vector<1x328x4xf32> to vector<328x4xf32>
    %c0_12 = arith.constant 0 : index
    %c36 = arith.constant 36 : index
    %c0_13 = arith.constant 0 : index
    %12 = vector.load %arg1[%c0_12, %c36, %c0_13] : memref<1x366x4xf32, #tpu.memory_space<vmem>>, vector<1x328x4xf32>
    %13 = vector.shape_cast %12 : vector<1x328x4xf32> to vector<328x4xf32>
    %c0_14 = arith.constant 0 : index
    %c37 = arith.constant 37 : index
    %c0_15 = arith.constant 0 : index
    %14 = vector.load %arg1[%c0_14, %c37, %c0_15] : memref<1x366x4xf32, #tpu.memory_space<vmem>>, vector<1x328x4xf32>
    %15 = vector.shape_cast %14 : vector<1x328x4xf32> to vector<328x4xf32>
    %c0_16 = arith.constant 0 : index
    %c38 = arith.constant 38 : index
    %c0_17 = arith.constant 0 : index
    %16 = vector.load %arg1[%c0_16, %c38, %c0_17] : memref<1x366x4xf32, #tpu.memory_space<vmem>>, vector<1x328x4xf32>
    %17 = vector.shape_cast %16 : vector<1x328x4xf32> to vector<328x4xf32>
    %cst = arith.constant 0.000000e+00 : f32
    %18 = vector.broadcast %cst : f32 to vector<328x92xf32>
    %19 = tpu.concatenate %1, %3, %5, %7, %9, %11, %13, %15, %17, %18 in 1 : vector<328x4xf32>, vector<328x4xf32>, vector<328x4xf32>, vector<328x4xf32>, vector<328x4xf32>, vector<328x4xf32>, vector<328x4xf32>, vector<328x4xf32>, vector<328x4xf32>, vector<328x92xf32> -> vector<328x128xf32>
    %20 = arith.truncf %19 : vector<328x128xf32> to vector<328x128xbf16>
    %c0_18 = arith.constant 0 : index
    %c0_19 = arith.constant 0 : index
    %21 = vector.load %arg3[%c0_18, %c0_19] : memref<128x128xbf16, #tpu.memory_space<vmem>>, vector<128x128xbf16>
    %cst_20 = arith.constant dense<0.000000e+00> : vector<328x128xf32>
    %22 = tpu.matmul %20, %21, %cst_20 {dimension_numbers = #tpu.dot_dimension_numbers<[1], [0], [0], [1], [0, 0, 1, 1], [], []>} : vector<328x128xbf16>, vector<128x128xbf16>, vector<328x128xf32> -> vector<328x128xf32>
    %c0_21 = arith.constant 0 : index
    %c0_22 = arith.constant 0 : index
    %23 = vector.load %arg4[%c0_21, %c0_22] : memref<1x128xf32, #tpu.memory_space<vmem>>, vector<1x128xf32>
    %24 = vector.broadcast %23 : vector<1x128xf32> to vector<328x128xf32>
    %25 = arith.addf %22, %24 : vector<328x128xf32>
    %cst_23 = arith.constant 0.000000e+00 : f32
    %26 = vector.broadcast %cst_23 : f32 to vector<328x128xf32>
    %27 = arith.maximumf %25, %26 : vector<328x128xf32>
    %c0_24 = arith.constant 0 : index
    %c0_25 = arith.constant 0 : index
    %28 = vector.load %arg2[%c0_24, %c0_25] : memref<328x1xf32, #tpu.memory_space<vmem>>, vector<328x1xf32>
    %29 = vector.broadcast %28 : vector<328x1xf32> to vector<328x128xf32>
    %30 = arith.mulf %27, %29 : vector<328x128xf32>
    %31 = vector.shape_cast %30 : vector<328x128xf32> to vector<41x8x128xf32>
    %cst_26 = arith.constant dense<0.000000e+00> : vector<8x128xf32>
    %32 = vector.multi_reduction <add>, %31, %cst_26 [0] : vector<41x8x128xf32> to vector<8x128xf32>
    %cst_27 = arith.constant dense<0.000000e+00> : vector<128xf32>
    %33 = vector.multi_reduction <add>, %32, %cst_27 [0] : vector<8x128xf32> to vector<128xf32>
    %34 = vector.shape_cast %33 : vector<128xf32> to vector<1x128xf32>
    %cst_28 = arith.constant 3.906250e-03 : f32
    %35 = vector.broadcast %cst_28 : f32 to vector<1x128xf32>
    %36 = arith.mulf %34, %35 : vector<1x128xf32>
    %37 = vector.shape_cast %36 : vector<1x128xf32> to vector<1x128xf32>
    %38 = vector.broadcast %37 : vector<1x128xf32> to vector<8x128xf32>
    %c0_29 = arith.constant 0 : index
    %c0_30 = arith.constant 0 : index
    %c0_31 = arith.constant 0 : index
    %39 = vector.load %arg5[%c0_29, %c0_30, %c0_31] : memref<1x8x128xf32, #tpu.memory_space<vmem>>, vector<1x8x128xf32>
    %40 = vector.shape_cast %39 : vector<1x8x128xf32> to vector<8x128xf32>
    %41 = vector.shape_cast %38 : vector<8x128xf32> to vector<1x8x128xf32>
    tpu.vector_store %arg5[%c0_29, %c0_30, %c0_31], %41 {strides = array<i32>} : memref<1x8x128xf32, #tpu.memory_space<vmem>>, vector<1x8x128xf32>,
    return
  }
  func.func @transform_0(%arg0: i32) -> (i32, i32, i32) {
    %c0_i32 = arith.constant 0 : i32
    %c0_i32_0 = arith.constant 0 : i32
    %c0_i32_1 = arith.constant 0 : i32
    return %arg0, %c0_i32, %c0_i32_0 : i32, i32, i32
  }
  func.func @transform_1(%arg0: i32) -> (i32, i32) {
    %c0_i32 = arith.constant 0 : i32
    %c0_i32_0 = arith.constant 0 : i32
    %c0_i32_1 = arith.constant 0 : i32
    return %c0_i32, %c0_i32_0 : i32, i32
  }
  func.func @transform_2(%arg0: i32) -> (i32, i32) {
    %c0_i32 = arith.constant 0 : i32
    %c0_i32_0 = arith.constant 0 : i32
    %c0_i32_1 = arith.constant 0 : i32
    return %c0_i32, %c0_i32_0 : i32, i32
  }
  func.func @transform_3(%arg0: i32) -> (i32, i32) {
    %c0_i32 = arith.constant 0 : i32
    %c0_i32_0 = arith.constant 0 : i32
    %c0_i32_1 = arith.constant 0 : i32
    return %c0_i32, %c0_i32_0 : i32, i32
  }
  func.func @transform_4(%arg0: i32) -> (i32, i32, i32) {
    %c0_i32 = arith.constant 0 : i32
    %c0_i32_0 = arith.constant 0 : i32
    %c0_i32_1 = arith.constant 0 : i32
    return %arg0, %c0_i32, %c0_i32_0 : i32, i32, i32
  }
}

module attributes {stable_mosaic.version = 11 : i64} {
  func.func @_classifier_kernel(%arg0: i32, %arg1: memref<2x128xf32, #tpu.memory_space<vmem>>, %arg2: memref<128x128xbf16, #tpu.memory_space<vmem>>, %arg3: memref<1x128xf32, #tpu.memory_space<vmem>>, %arg4: memref<2x128xf32, #tpu.memory_space<vmem>>) attributes {dimension_semantics = [#tpu.dimension_semantics<arbitrary>], iteration_bounds = array<i64: 1>, scalar_prefetch = 0 : i64, scratch_operands = 0 : i64, tpu.core_type = #tpu.core_type<tc>, window_params = [{pipeline_mode = #tpu.pipeline_mode<synchronous>, transform_indices = @transform_0, window_bounds = array<i64: 2, 128>}, {pipeline_mode = #tpu.pipeline_mode<synchronous>, transform_indices = @transform_1, window_bounds = array<i64: 128, 128>}, {pipeline_mode = #tpu.pipeline_mode<synchronous>, transform_indices = @transform_2, window_bounds = array<i64: 1, 128>}, {pipeline_mode = #tpu.pipeline_mode<synchronous>, transform_indices = @transform_3, window_bounds = array<i64: 2, 128>}]} {
    %c0 = arith.constant 0 : index
    %c0_0 = arith.constant 0 : index
    %0 = vector.load %arg1[%c0, %c0_0] : memref<2x128xf32, #tpu.memory_space<vmem>>, vector<2x128xf32>
    %1 = arith.truncf %0 : vector<2x128xf32> to vector<2x128xbf16>
    %c0_1 = arith.constant 0 : index
    %c0_2 = arith.constant 0 : index
    %2 = vector.load %arg2[%c0_1, %c0_2] : memref<128x128xbf16, #tpu.memory_space<vmem>>, vector<128x128xbf16>
    %cst = arith.constant dense<0.000000e+00> : vector<2x128xf32>
    %3 = tpu.matmul %1, %2, %cst {dimension_numbers = #tpu.dot_dimension_numbers<[1], [0], [0], [1], [0, 0, 1, 1], [], []>} : vector<2x128xbf16>, vector<128x128xbf16>, vector<2x128xf32> -> vector<2x128xf32>
    %c0_3 = arith.constant 0 : index
    %c0_4 = arith.constant 0 : index
    %4 = vector.load %arg3[%c0_3, %c0_4] : memref<1x128xf32, #tpu.memory_space<vmem>>, vector<1x128xf32>
    %5 = vector.broadcast %4 : vector<1x128xf32> to vector<2x128xf32>
    %6 = arith.addf %3, %5 : vector<2x128xf32>
    %c0_5 = arith.constant 0 : index
    %c0_6 = arith.constant 0 : index
    %7 = vector.load %arg4[%c0_5, %c0_6] : memref<2x128xf32, #tpu.memory_space<vmem>>, vector<2x128xf32>
    tpu.vector_store %arg4[%c0_5, %c0_6], %6 {strides = array<i32>} : memref<2x128xf32, #tpu.memory_space<vmem>>, vector<2x128xf32>,
    return
  }
  func.func @transform_0(%arg0: i32) -> (i32, i32) {
    %c0_i32 = arith.constant 0 : i32
    %c0_i32_0 = arith.constant 0 : i32
    %c0_i32_1 = arith.constant 0 : i32
    return %c0_i32, %c0_i32_0 : i32, i32
  }
  func.func @transform_1(%arg0: i32) -> (i32, i32) {
    %c0_i32 = arith.constant 0 : i32
    %c0_i32_0 = arith.constant 0 : i32
    %c0_i32_1 = arith.constant 0 : i32
    return %c0_i32, %c0_i32_0 : i32, i32
  }
  func.func @transform_2(%arg0: i32) -> (i32, i32) {
    %c0_i32 = arith.constant 0 : i32
    %c0_i32_0 = arith.constant 0 : i32
    %c0_i32_1 = arith.constant 0 : i32
    return %c0_i32, %c0_i32_0 : i32, i32
  }
  func.func @transform_3(%arg0: i32) -> (i32, i32) {
    %c0_i32 = arith.constant 0 : i32
    %c0_i32_0 = arith.constant 0 : i32
    %c0_i32_1 = arith.constant 0 : i32
    return %c0_i32, %c0_i32_0 : i32, i32
  }
}

</mosaic_0001>

<llo_original>
// kernel: tv_model_forward.3
$region0: #{tv_model_forward.3}
  #allocation0 [shape = 'u32[]', space=smem, size = 0x4, offset = 0x4, fixed_abs, tag = 'smem constant byte address 0x4 - core index']
  #allocation1 [shape = 'u32[144,128]{1,0:T(1,128)}', space=vmem, size = 0x12000, scoped, tag = 'internal scratch']
  %s0 = inlined_call_operand.vmem [shape: f32[2,128], index: 0, kind: input, shape index: {}]
  %s1 = inlined_call_operand.vmem [shape: bf16[128,128], index: 1, kind: input, shape index: {}]
  %s2 = inlined_call_operand.vmem [shape: f32[1,128], index: 2, kind: input, shape index: {}]
  %s3 = inlined_call_operand.hbm [shape: f32[2,128], index: 3, kind: output, shape index: {}]
  %s4 = sld [smem:[#allocation0]]
  $region22: #{tv_model_forward.3} parent=0
    _
  %s6 = ssub.s32 1, %s4
  %s7 = scalar_select 0, %s6, %s4
  $region1: #{tv_model_forward.3} parent=0
    #allocation2 [shape = 'u8[1024]{0}', space=vmem, size = 0x400, scoped, tag = 'output window, operand 0, single buffered']
    #allocation3 [shape = 's32[1]{0}', space=sflag, size = 0x4, scoped, tag = 'scoped memory for tv_model_forward.3']
    %8 = vsyncpa [#allocation3], 0
    // Predicated region
    $region2: #{tv_model_forward.3} parent=1 // pred_check
      _
    $region3: #{tv_model_forward.3} parent=1 // pred_check_branch
      %10 = sbr.rel (0) target = $region5
    $region4: #{tv_model_forward.3} parent=1 // pred_region
      _
    $region5: #{tv_model_forward.3} parent=1 // pred_fallthru
      _
    // Predicated region
    $region6: #{tv_model_forward.3} parent=1 // pred_check
      _
    $region7: #{tv_model_forward.3} parent=1 // pred_check_branch
      %12 = sbr.rel (0) target = $region9
    $region8: #{tv_model_forward.3} parent=1 // pred_region
      _
    $region9: #{tv_model_forward.3} parent=1 // pred_fallthru
      _
    // Predicated region
    $region10: #{tv_model_forward.3} parent=1 // pred_check
      _
    $region11: #{tv_model_forward.3} parent=1 // pred_check_branch
      %14 = sbr.rel (0) target = $region13
    $region12: #{tv_model_forward.3} parent=1 // pred_region
      _
    $region13: #{tv_model_forward.3} parent=1 // pred_fallthru
      _
    %v16 = vld [vmem:[%s0] sm:$0x3]
    %v17 = vpack.c.bf16 %v16, %v16
    %v18 = vld [vmem:[%s1] sm:$0xf]
    %v19 = vld [vmem:[%s1 + $0x4] sm:$0xf]
    %v20 = vld [vmem:[%s1 + $0x8] sm:$0xf]
    %v21 = vld [vmem:[%s1 + $0xc] sm:$0xf]
    %v22 = vld [vmem:[%s1 + $0x10] sm:$0xf]
    %v23 = vld [vmem:[%s1 + $0x14] sm:$0xf]
    %v24 = vld [vmem:[%s1 + $0x18] sm:$0xf]
    %v25 = vld [vmem:[%s1 + $0x1c] sm:$0xf]
    %v26 = vld [vmem:[%s1 + $0x20] sm:$0xf]
    %v27 = vld [vmem:[%s1 + $0x24] sm:$0xf]
    %v28 = vld [vmem:[%s1 + $0x28] sm:$0xf]
    %v29 = vld [vmem:[%s1 + $0x2c] sm:$0xf]
    %v30 = vld [vmem:[%s1 + $0x30] sm:$0xf]
    %v31 = vld [vmem:[%s1 + $0x34] sm:$0xf]
    %v32 = vld [vmem:[%s1 + $0x38] sm:$0xf]
    %v33 = vld [vmem:[%s1 + $0x3c] sm:$0xf]
    %v34 = vld [vmem:[%s2] sm:$0x1]
    %v36 = vlaneseq
    %v37 = vshrl.u32 %v36, 7
    %v38 = vsub.s32 0, %v37
    %v39 = vrot.slane %v34, %v38
    %v57 = vunpack.c.l.b16 %v18
    %v58 = vunpack.c.l.b16 %v19
    %v59 = vunpack.c.l.b16 %v20
    %v60 = vunpack.c.l.b16 %v21
    %v61 = vunpack.c.l.b16 %v22
    %v62 = vunpack.c.l.b16 %v23
    %v63 = vunpack.c.l.b16 %v24
    %v64 = vunpack.c.l.b16 %v25
    %v65 = vunpack.c.l.b16 %v26
    %v66 = vunpack.c.l.b16 %v27
    %v67 = vunpack.c.l.b16 %v28
    %v68 = vunpack.c.l.b16 %v29
    %v69 = vunpack.c.l.b16 %v30
    %v70 = vunpack.c.l.b16 %v31
    %v71 = vunpack.c.l.b16 %v32
    %v72 = vunpack.c.l.b16 %v33
    %v73 = vpack.c.b16 %v58, %v57
    %v74 = vpack.c.b16 %v60, %v59
    %v75 = vpack.c.b16 %v62, %v61
    %v76 = vpack.c.b16 %v64, %v63
    %v77 = vpack.c.b16 %v66, %v65
    %v78 = vpack.c.b16 %v68, %v67
    %v79 = vpack.c.b16 %v70, %v69
    %v80 = vpack.c.b16 %v72, %v71
    %89 = vmatprep.subr.bf16.mxu0 0
    %90 = vmatpush1.bf16.msra.mxu0 %v73
    %91 = vmatprep.subr.bf16.mxu0 0
    %92 = vmatpush1.bf16.msra.mxu0 %v74
    %93 = vmatprep.subr.bf16.mxu0 0
    %94 = vmatpush1.bf16.msra.mxu0 %v75
    %95 = vmatprep.subr.bf16.mxu0 0
    %96 = vmatpush1.bf16.msra.mxu0 %v76
    %97 = vmatprep.subr.bf16.mxu0 0
    %98 = vmatpush1.bf16.msra.mxu0 %v77
    %99 = vmatprep.subr.bf16.mxu0 0
    %100 = vmatpush1.bf16.msra.mxu0 %v78
    %101 = vmatprep.subr.bf16.mxu0 0
    %102 = vmatpush1.bf16.msra.mxu0 %v79
    %103 = vmatprep.subr.bf16.mxu0 0
    %104 = vmatpush1.bf16.msra.mxu0 %v80
    %105 = vmatprep.subr.bf16.mxu0 0
    %106 = vmatpush1.bf16.msra.mxu0 0
    %107 = vmatprep.subr.bf16.mxu0 0
    %108 = vmatpush1.bf16.msra.mxu0 0
    %109 = vmatprep.subr.bf16.mxu0 0
    %110 = vmatpush1.bf16.msra.mxu0 0
    %111 = vmatprep.subr.bf16.mxu0 0
    %112 = vmatpush1.bf16.msra.mxu0 0
    %113 = vmatprep.subr.bf16.mxu0 0
    %114 = vmatpush1.bf16.msra.mxu0 0
    %115 = vmatprep.subr.bf16.mxu0 0
    %116 = vmatpush1.bf16.msra.mxu0 0
    %117 = vmatprep.subr.bf16.mxu0 0
    %118 = vmatpush1.bf16.msra.mxu0 0
    %119 = vmatprep.subr.bf16.mxu0 0
    %120 = vmatpush1.bf16.msra.mxu0 0
    %121 = vmatprep.mubr.bf16.mxu0 0
    %122 = vmatmul.mubr.bf16.gmra.mrb[0].mxu0 %v17
    %v123 = vpop.f32.mrb[0].mxu0
    %v124 = vadd.f32 %v39, %v123
    %v125 = vpop.f32.mrb[0].mxu0
    %v126 = vpop.f32.mrb[0].mxu0
    %v127 = vpop.f32.mrb[0].mxu0
    %128 = vdwg.mxu0
    %129 = vst [vmem:[#allocation2] sm:$0x3] %v124
    // Predicated region
    $region14: #{tv_model_forward.3} parent=1 // pred_check
      _
    $region15: #{tv_model_forward.3} parent=1 // pred_check_branch
      %131 = sbr.rel (0) target = $region17
    $region16: #{tv_model_forward.3} parent=1 // pred_region
      %s133 = ssub.s32 32, 32
      %134 = vsyncadd [#allocation3], %s133
      %s136 = sshll.u32 [#allocation2], 4
      %s137 = int_to_ptr.vmem [resolvable:$true] %s136
      %139 = dma.vmem_to_hbm [thread:$0]  %s137, 32, %s3, [#allocation3]
    $region17: #{tv_model_forward.3} parent=1 // pred_fallthru
      _
    // Predicated region
    $region18: #{tv_model_forward.3} parent=1 // pred_check
      _
    $region19: #{tv_model_forward.3} parent=1 // pred_check_branch
      %141 = sbr.rel (0) target = $region21
    $region20: #{tv_model_forward.3} parent=1 // pred_region
      %142 = dma.done [#allocation3], 32
    $region21: #{tv_model_forward.3} parent=1 // pred_fallthru
      _
    %143 = vsyncpa [#allocation3], 1

// kernel: tv_model_forward.2
$region0: #{tv_model_forward.2}
  #allocation0 [shape = 'u32[]', space=smem, size = 0x4, offset = 0x4, fixed_abs, tag = 'smem constant byte address 0x4 - core index']
  #allocation1 [shape = 'u32[144,128]{1,0:T(1,128)}', space=vmem, size = 0x12000, scoped, tag = 'internal scratch']
  %s0 = inlined_call_operand.vmem [shape: f32[2,366,4], index: 0, kind: input, shape index: {}]
  %s1 = inlined_call_operand.vmem [shape: f32[328,1], index: 1, kind: input, shape index: {}]
  %s2 = inlined_call_operand.vmem [shape: bf16[128,128], index: 2, kind: input, shape index: {}]
  %s3 = inlined_call_operand.vmem [shape: f32[1,128], index: 3, kind: input, shape index: {}]
  %s4 = inlined_call_operand.vmem [shape: f32[2,8,128], index: 4, kind: output, shape index: {}]
  %s5 = sld [smem:[#allocation0]]
  $region49: #{tv_model_forward.2} parent=0
    _
  %s7 = ssub.s32 1, %s5
  %s8 = scalar_select 0, %s7, %s5
  loop: start=0, step=1, limit=4
  $region2: #{tv_model_forward.2} parent=0 // loop_pre_header
    _
  $region3: #{tv_model_forward.2} parent=0 // loop_header
    %s10 = sphi 0, %s14
    %p11 = scmp.ge.s32.totalorder %s10, 4
    %s20 = sphi 0, %s22
    %s23 = sphi 0, %s20
    %s24 = sphi 0, %s23
    %s40 = sphi 0, %s24
    %s44 = sphi 0, %s44
    %s46 = sphi 0, %s44
    %s47 = sphi 0, %s46
    %s61 = sphi 0, %s47
    %s65 = sphi 0, %s65
    %s67 = sphi 0, %s65
    %s68 = sphi 0, %s67
    %s82 = sphi 0, %s68
    %s86 = sphi 0, %s86
    %s88 = sphi 0, %s86
    %s89 = sphi 0, %s88
    %s103 = sphi 0, %s89
    %s109 = sphi 0, %s111
    %s112 = sphi 0, %s109
    %s113 = sphi 0, %s112
    %s129 = sphi 0, %s113
  $region4: #{tv_model_forward.2} parent=0 // loop_header_branch
    %13 = sbr.rel (%p11) target = $region8
  $region5: #{tv_model_forward.2} parent=0 // loop_body
    %s15 = ssub.s32 %s10, 1
    %s16 = ssub.s32 %s10, 2
    %s17 = sadd.s32 %s10, 1
    %s18 = ssub.s32 %s10, %s17
    %p19 = scmp.eq.s32.totalorder %s18, 0
    %s21 = sadd.s32 %s20, 1
    %s22 = scalar_select %p19, %s20, %s21
    %p25 = pneg %p19
    %p26 = scmp.eq.s32.totalorder %s10, 1
    %p27 = por %p25, %p26
    %p28 = scmp.ne.s32.totalorder %s20, %s23
    %p29 = scmp.eq.s32.totalorder %s10, 0
    %p30 = por %p28, %p29
    %p31 = scmp.ne.s32.totalorder %s20, %s23
    %p32 = scmp.eq.s32.totalorder %s15, 1
    %p33 = por %p31, %p32
    %p34 = scmp.ne.s32.totalorder %s23, %s24
    %p35 = scmp.eq.s32.totalorder %s15, 0
    %p36 = por %p34, %p35
    %p37 = scmp.ne.s32.totalorder %s23, %s24
    %p38 = scmp.eq.s32.totalorder %s16, 1
    %p39 = por %p37, %p38
    %p41 = scmp.ne.s32.totalorder %s24, %s40
    %p42 = scmp.eq.s32.totalorder %s16, 0
    %p43 = por %p41, %p42
    %s45 = sadd.s32 %s44, 1
    %p48 = scmp.eq.s32.totalorder %s10, 1
    %p49 = scmp.ne.s32.totalorder %s44, %s46
    %p50 = scmp.eq.s32.totalorder %s10, 0
    %p51 = por %p49, %p50
    %p52 = scmp.ne.s32.totalorder %s44, %s46
    %p53 = scmp.eq.s32.totalorder %s15, 1
    %p54 = por %p52, %p53
    %p55 = scmp.ne.s32.totalorder %s46, %s47
    %p56 = scmp.eq.s32.totalorder %s15, 0
    %p57 = por %p55, %p56
    %p58 = scmp.ne.s32.totalorder %s46, %s47
    %p59 = scmp.eq.s32.totalorder %s16, 1
    %p60 = por %p58, %p59
    %p62 = scmp.ne.s32.totalorder %s47, %s61
    %p63 = scmp.eq.s32.totalorder %s16, 0
    %p64 = por %p62, %p63
    %s66 = sadd.s32 %s65, 1
    %p69 = scmp.eq.s32.totalorder %s10, 1
    %p70 = scmp.ne.s32.totalorder %s65, %s67
    %p71 = scmp.eq.s32.totalorder %s10, 0
    %p72 = por %p70, %p71
    %p73 = scmp.ne.s32.totalorder %s65, %s67
    %p74 = scmp.eq.s32.totalorder %s15, 1
    %p75 = por %p73, %p74
    %p76 = scmp.ne.s32.totalorder %s67, %s68
    %p77 = scmp.eq.s32.totalorder %s15, 0
    %p78 = por %p76, %p77
    %p79 = scmp.ne.s32.totalorder %s67, %s68
    %p80 = scmp.eq.s32.totalorder %s16, 1
    %p81 = por %p79, %p80
    %p83 = scmp.ne.s32.totalorder %s68, %s82
    %p84 = scmp.eq.s32.totalorder %s16, 0
    %p85 = por %p83, %p84
    %s87 = sadd.s32 %s86, 1
    %p90 = scmp.eq.s32.totalorder %s10, 1
    %p91 = scmp.ne.s32.totalorder %s86, %s88
    %p92 = scmp.eq.s32.totalorder %s10, 0
    %p93 = por %p91, %p92
    %p94 = scmp.ne.s32.totalorder %s86, %s88
    %p95 = scmp.eq.s32.totalorder %s15, 1
    %p96 = por %p94, %p95
    %p97 = scmp.ne.s32.totalorder %s88, %s89
    %p98 = scmp.eq.s32.totalorder %s15, 0
    %p99 = por %p97, %p98
    %p100 = scmp.ne.s32.totalorder %s88, %s89
    %p101 = scmp.eq.s32.totalorder %s16, 1
    %p102 = por %p100, %p101
    %p104 = scmp.ne.s32.totalorder %s89, %s103
    %p105 = scmp.eq.s32.totalorder %s16, 0
    %p106 = por %p104, %p105
    %s107 = ssub.s32 %s10, %s17
    %p108 = scmp.eq.s32.totalorder %s107, 0
    %s110 = sadd.s32 %s109, 1
    %s111 = scalar_select %p108, %s109, %s110
    %p114 = pneg %p108
    %p115 = scmp.eq.s32.totalorder %s10, 1
    %p116 = por %p114, %p115
    %p117 = scmp.ne.s32.totalorder %s109, %s112
    %p118 = scmp.eq.s32.totalorder %s10, 0
    %p119 = por %p117, %p118
    %p120 = scmp.ne.s32.totalorder %s109, %s112
    %p121 = scmp.eq.s32.totalorder %s15, 1
    %p122 = por %p120, %p121
    %p123 = scmp.ne.s32.totalorder %s112, %s113
    %p124 = scmp.eq.s32.totalorder %s15, 0
    %p125 = por %p123, %p124
    %p126 = scmp.ne.s32.totalorder %s112, %s113
    %p127 = scmp.eq.s32.totalorder %s16, 1
    %p128 = por %p126, %p127
    %p130 = scmp.ne.s32.totalorder %s113, %s129
    %p131 = scmp.eq.s32.totalorder %s16, 0
    %p132 = por %p130, %p131
    %p133 = scmp.le.s32.totalorder 1, %s10
    %p134 = scmp.lt.s32.totalorder %s10, 3
    %p135 = pnand %p133, %p134
    %p136 = pneg %p135
    // Predicated region
    $region9: #{tv_model_forward.2} parent=5 // pred_check
      _
    $region10: #{tv_model_forward.2} parent=5 // pred_check_branch
      %138 = sbr.rel (%p135) target = $region12
    $region11: #{tv_model_forward.2} parent=5 // pred_region
      %s139 = ssub.s32 %s10, 1
      // Predicated region
      $region13: #{tv_model_forward.2} parent=11 // pred_check
        %p140 = pneg %p57
      $region14: #{tv_model_forward.2} parent=11 // pred_check_branch
        %142 = sbr.rel (%p140) target = $region16
      $region15: #{tv_model_forward.2} parent=11 // pred_region
        _
      $region16: #{tv_model_forward.2} parent=11 // pred_fallthru
        _
      // Predicated region
      $region17: #{tv_model_forward.2} parent=11 // pred_check
        %p143 = pneg %p78
      $region18: #{tv_model_forward.2} parent=11 // pred_check_branch
        %145 = sbr.rel (%p143) target = $region20
      $region19: #{tv_model_forward.2} parent=11 // pred_region
        _
      $region20: #{tv_model_forward.2} parent=11 // pred_fallthru
        _
      // Predicated region
      $region21: #{tv_model_forward.2} parent=11 // pred_check
        %p146 = pneg %p99
      $region22: #{tv_model_forward.2} parent=11 // pred_check_branch
        %148 = sbr.rel (%p146) target = $region24
      $region23: #{tv_model_forward.2} parent=11 // pred_region
        _
      $region24: #{tv_model_forward.2} parent=11 // pred_fallthru
        _
    $region12: #{tv_model_forward.2} parent=5 // pred_fallthru
      _
    %p149 = scmp.lt.s32.totalorder %s10, 2
    // Predicated region
    $region25: #{tv_model_forward.2} parent=5 // pred_check
      %p150 = pneg %p149
    $region26: #{tv_model_forward.2} parent=5 // pred_check_branch
      %152 = sbr.rel (%p150) target = $region28
    $region27: #{tv_model_forward.2} parent=5 // pred_region
      // Predicated region
      $region29: #{tv_model_forward.2} parent=27 // pred_check
        %p153 = pneg %p30
      $region30: #{tv_model_forward.2} parent=27 // pred_check_branch
        %155 = sbr.rel (%p153) target = $region32
      $region31: #{tv_model_forward.2} parent=27 // pred_region
        %p156 = scmp.lt.s32.totalorder %s10, 1
        %s157 = scalar_select %p156, %s10, 1
        %s158 = smul.addr %s157, 46
        %s159 = smul.addr %s158, 8
        %s160 = scalar_lea.vmem %s0, %s159
      $region32: #{tv_model_forward.2} parent=27 // pred_fallthru
        _
    $region28: #{tv_model_forward.2} parent=5 // pred_fallthru
      _
    %p161 = scmp.le.s32.totalorder 1, %s10
    %p162 = scmp.lt.s32.totalorder %s10, 3
    %p163 = pnand %p161, %p162
    %p164 = pneg %p163
    // Predicated region
    $region33: #{tv_model_forward.2} parent=5 // pred_check
      _
    $region34: #{tv_model_forward.2} parent=5 // pred_check_branch
      %166 = sbr.rel (%p163) target = $region36
    $region35: #{tv_model_forward.2} parent=5 // pred_region
      %s167 = ssub.s32 %s10, 1
      %p168 = scmp.lt.s32.totalorder %s15, 1
      %s169 = scalar_select %p168, %s15, 1
      %s170 = smul.addr %s169, 46
      %s171 = smul.addr %s170, 8
      %s172 = scalar_lea.vmem %s0, %s171
      %p173 = pneg %p36
      %p174 = pneg %p33
      %p175 = pneg %p57
      %p176 = pneg %p54
      %p177 = pneg %p78
      %p178 = pneg %p75
      %p179 = pneg %p99
      %p180 = pneg %p96
      %p181 = pneg %p125
      %p182 = pneg %p122
      %p183 = scmp.lt.s32.totalorder %s15, 1
      %s184 = scalar_select %p183, %s15, 1
      %s185 = smul.addr %s184, 8
      %s186 = scalar_lea.vmem %s4, %s185
      %p187 = scmp.lt.s32.totalorder %s15, 1
      %s188 = scalar_select %p187, %s15, 1
      %s189 = smul.addr %s188, 46
      %s190 = smul.addr %s189, 8
      %s191 = scalar_lea.vmem %s0, %s190
      %p192 = scmp.lt.s32.totalorder %s15, 1
      %s193 = scalar_select %p192, %s15, 1
      %s194 = smul.addr %s193, 8
      %s195 = scalar_lea.vmem %s4, %s194
      %v197 = vld [vmem:[%s191] sm:$0xff]
      %v198 = vld [vmem:[%s191 + $0x8] sm:$0xff]
      %v199 = vld [vmem:[%s191 + $0x10] sm:$0xff]
      %v200 = vld [vmem:[%s191 + $0x18] sm:$0xff]
      %v201 = vld [vmem:[%s191 + $0x20] sm:$0xff]
      %v202 = vld [vmem:[%s191 + $0x28] sm:$0xff]
      %v203 = vld [vmem:[%s191 + $0x30] sm:$0xff]
      %v204 = vld [vmem:[%s191 + $0x38] sm:$0xff]
      %v205 = vld [vmem:[%s191 + $0x40] sm:$0xff]
      %v206 = vld [vmem:[%s191 + $0x48] sm:$0xff]
      %v207 = vld [vmem:[%s191 + $0x50] sm:$0xff]
      %v208 = vld [vmem:[%s191 + $0x58] sm:$0xff]
      %v209 = vld [vmem:[%s191 + $0x60] sm:$0xff]
      %v210 = vld [vmem:[%s191 + $0x68] sm:$0xff]
      %v211 = vld [vmem:[%s191 + $0x70] sm:$0xff]
      %v212 = vld [vmem:[%s191 + $0x78] sm:$0xff]
      %v213 = vld [vmem:[%s191 + $0x80] sm:$0xff]
      %v214 = vld [vmem:[%s191 + $0x88] sm:$0xff]
      %v215 = vld [vmem:[%s191 + $0x90] sm:$0xff]
      %v216 = vld [vmem:[%s191 + $0x98] sm:$0xff]
      %v217 = vld [vmem:[%s191 + $0xa0] sm:$0xff]
      %v218 = vld [vmem:[%s191 + $0xa8] sm:$0xff]
      %v219 = vld [vmem:[%s191 + $0xb0] sm:$0xff]
      %v220 = vld [vmem:[%s191 + $0xb8] sm:$0xff]
      %v221 = vld [vmem:[%s191 + $0xc0] sm:$0xff]
      %v222 = vld [vmem:[%s191 + $0xc8] sm:$0xff]
      %v223 = vld [vmem:[%s191 + $0xd0] sm:$0xff]
      %v224 = vld [vmem:[%s191 + $0xd8] sm:$0xff]
      %v225 = vld [vmem:[%s191 + $0xe0] sm:$0xff]
      %v226 = vld [vmem:[%s191 + $0xe8] sm:$0xff]
      %v227 = vld [vmem:[%s191 + $0xf0] sm:$0xff]
      %v228 = vld [vmem:[%s191 + $0xf8] sm:$0xff]
      %v229 = vld [vmem:[%s191 + $0x100] sm:$0xff]
      %v230 = vld [vmem:[%s191 + $0x108] sm:$0xff]
      %v231 = vld [vmem:[%s191 + $0x110] sm:$0xff]
      %v232 = vld [vmem:[%s191 + $0x118] sm:$0xff]
      %v233 = vld [vmem:[%s191 + $0x120] sm:$0xff]
      %v234 = vld [vmem:[%s191 + $0x128] sm:$0xff]
      %v235 = vld [vmem:[%s191 + $0x130] sm:$0xff]
      %v236 = vld [vmem:[%s191 + $0x138] sm:$0xff]
      %v237 = vld [vmem:[%s191 + $0x140] sm:$0xff]
      %v238 = vld [vmem:[%s191 + $0x1] sm:$0xff]
      %v239 = vld [vmem:[%s191 + $0x9] sm:$0xff]
      %v240 = vld [vmem:[%s191 + $0x11] sm:$0xff]
      %v241 = vld [vmem:[%s191 + $0x19] sm:$0xff]
      %v242 = vld [vmem:[%s191 + $0x21] sm:$0xff]
      %v243 = vld [vmem:[%s191 + $0x29] sm:$0xff]
      %v244 = vld [vmem:[%s191 + $0x31] sm:$0xff]
      %v245 = vld [vmem:[%s191 + $0x39] sm:$0xff]
      %v246 = vld [vmem:[%s191 + $0x41] sm:$0xff]
      %v247 = vld [vmem:[%s191 + $0x49] sm:$0xff]
      %v248 = vld [vmem:[%s191 + $0x51] sm:$0xff]
      %v249 = vld [vmem:[%s191 + $0x59] sm:$0xff]
      %v250 = vld [vmem:[%s191 + $0x61] sm:$0xff]
      %v251 = vld [vmem:[%s191 + $0x69] sm:$0xff]
      %v252 = vld [vmem:[%s191 + $0x71] sm:$0xff]
      %v253 = vld [vmem:[%s191 + $0x79] sm:$0xff]
      %v254 = vld [vmem:[%s191 + $0x81] sm:$0xff]
      %v255 = vld [vmem:[%s191 + $0x89] sm:$0xff]
      %v256 = vld [vmem:[%s191 + $0x91] sm:$0xff]
      %v257 = vld [vmem:[%s191 + $0x99] sm:$0xff]
      %v258 = vld [vmem:[%s191 + $0xa1] sm:$0xff]
      %v259 = vld [vmem:[%s191 + $0xa9] sm:$0xff]
      %v260 = vld [vmem:[%s191 + $0xb1] sm:$0xff]
      %v261 = vld [vmem:[%s191 + $0xb9] sm:$0xff]
      %v262 = vld [vmem:[%s191 + $0xc1] sm:$0xff]
      %v263 = vld [vmem:[%s191 + $0xc9] sm:$0xff]
      %v264 = vld [vmem:[%s191 + $0xd1] sm:$0xff]
      %v265 = vld [vmem:[%s191 + $0xd9] sm:$0xff]
      %v266 = vld [vmem:[%s191 + $0xe1] sm:$0xff]
      %v267 = vld [vmem:[%s191 + $0xe9] sm:$0xff]
      %v268 = vld [vmem:[%s191 + $0xf1] sm:$0xff]
      %v269 = vld [vmem:[%s191 + $0xf9] sm:$0xff]
      %v270 = vld [vmem:[%s191 + $0x101] sm:$0xff]
      %v271 = vld [vmem:[%s191 + $0x109] sm:$0xff]
      %v272 = vld [vmem:[%s191 + $0x111] sm:$0xff]
      %v273 = vld [vmem:[%s191 + $0x119] sm:$0xff]
      %v274 = vld [vmem:[%s191 + $0x121] sm:$0xff]
      %v275 = vld [vmem:[%s191 + $0x129] sm:$0xff]
      %v276 = vld [vmem:[%s191 + $0x131] sm:$0xff]
      %v277 = vld [vmem:[%s191 + $0x139] sm:$0xff]
      %v278 = vld [vmem:[%s191 + $0x141] sm:$0xff]
      %v279 = vld [vmem:[%s191 + $0x2] sm:$0xff]
      %v280 = vld [vmem:[%s191 + $0xa] sm:$0xff]
      %v281 = vld [vmem:[%s191 + $0x12] sm:$0xff]
      %v282 = vld [vmem:[%s191 + $0x1a] sm:$0xff]
      %v283 = vld [vmem:[%s191 + $0x22] sm:$0xff]
      %v284 = vld [vmem:[%s191 + $0x2a] sm:$0xff]
      %v285 = vld [vmem:[%s191 + $0x32] sm:$0xff]
      %v286 = vld [vmem:[%s191 + $0x3a] sm:$0xff]
      %v287 = vld [vmem:[%s191 + $0x42] sm:$0xff]
      %v288 = vld [vmem:[%s191 + $0x4a] sm:$0xff]
      %v289 = vld [vmem:[%s191 + $0x52] sm:$0xff]
      %v290 = vld [vmem:[%s191 + $0x5a] sm:$0xff]
      %v291 = vld [vmem:[%s191 + $0x62] sm:$0xff]
      %v292 = vld [vmem:[%s191 + $0x6a] sm:$0xff]
      %v293 = vld [vmem:[%s191 + $0x72] sm:$0xff]
      %v294 = vld [vmem:[%s191 + $0x7a] sm:$0xff]
      %v295 = vld [vmem:[%s191 + $0x82] sm:$0xff]
      %v296 = vld [vmem:[%s191 + $0x8a] sm:$0xff]
      %v297 = vld [vmem:[%s191 + $0x92] sm:$0xff]
      %v298 = vld [vmem:[%s191 + $0x9a] sm:$0xff]
      %v299 = vld [vmem:[%s191 + $0xa2] sm:$0xff]
      %v300 = vld [vmem:[%s191 + $0xaa] sm:$0xff]
      %v301 = vld [vmem:[%s191 + $0xb2] sm:$0xff]
      %v302 = vld [vmem:[%s191 + $0xba] sm:$0xff]
      %v303 = vld [vmem:[%s191 + $0xc2] sm:$0xff]
      %v304 = vld [vmem:[%s191 + $0xca] sm:$0xff]
      %v305 = vld [vmem:[%s191 + $0xd2] sm:$0xff]
      %v306 = vld [vmem:[%s191 + $0xda] sm:$0xff]
      %v307 = vld [vmem:[%s191 + $0xe2] sm:$0xff]
      %v308 = vld [vmem:[%s191 + $0xea] sm:$0xff]
      %v309 = vld [vmem:[%s191 + $0xf2] sm:$0xff]
      %v310 = vld [vmem:[%s191 + $0xfa] sm:$0xff]
      %v311 = vld [vmem:[%s191 + $0x102] sm:$0xff]
      %v312 = vld [vmem:[%s191 + $0x10a] sm:$0xff]
      %v313 = vld [vmem:[%s191 + $0x112] sm:$0xff]
      %v314 = vld [vmem:[%s191 + $0x11a] sm:$0xff]
      %v315 = vld [vmem:[%s191 + $0x122] sm:$0xff]
      %v316 = vld [vmem:[%s191 + $0x12a] sm:$0xff]
      %v317 = vld [vmem:[%s191 + $0x132] sm:$0xff]
      %v318 = vld [vmem:[%s191 + $0x13a] sm:$0xff]
      %v319 = vld [vmem:[%s191 + $0x142] sm:$0xff]
      %v320 = vld [vmem:[%s191 + $0x14a] sm:$0xff]
      %v321 = vld [vmem:[%s191 + $0x152] sm:$0xff]
      %v322 = vld [vmem:[%s191 + $0x13] sm:$0xff]
      %v323 = vld [vmem:[%s191 + $0x1b] sm:$0xff]
      %v324 = vld [vmem:[%s191 + $0x23] sm:$0xff]
      %v325 = vld [vmem:[%s191 + $0x2b] sm:$0xff]
      %v326 = vld [vmem:[%s191 + $0x33] sm:$0xff]
      %v327 = vld [vmem:[%s191 + $0x3b] sm:$0xff]
      %v328 = vld [vmem:[%s191 + $0x43] sm:$0xff]
      %v329 = vld [vmem:[%s191 + $0x4b] sm:$0xff]
      %v330 = vld [vmem:[%s191 + $0x53] sm:$0xff]
      %v331 = vld [vmem:[%s191 + $0x5b] sm:$0xff]
      %v332 = vld [vmem:[%s191 + $0x63] sm:$0xff]
      %v333 = vld [vmem:[%s191 + $0x6b] sm:$0xff]
      %v334 = vld [vmem:[%s191 + $0x73] sm:$0xff]
      %v335 = vld [vmem:[%s191 + $0x7b] sm:$0xff]
      %v336 = vld [vmem:[%s191 + $0x83] sm:$0xff]
      %v337 = vld [vmem:[%s191 + $0x8b] sm:$0xff]
      %v338 = vld [vmem:[%s191 + $0x93] sm:$0xff]
      %v339 = vld [vmem:[%s191 + $0x9b] sm:$0xff]
      %v340 = vld [vmem:[%s191 + $0xa3] sm:$0xff]
      %v341 = vld [vmem:[%s191 + $0xab] sm:$0xff]
      %v342 = vld [vmem:[%s191 + $0xb3] sm:$0xff]
      %v343 = vld [vmem:[%s191 + $0xbb] sm:$0xff]
      %v344 = vld [vmem:[%s191 + $0xc3] sm:$0xff]
      %v345 = vld [vmem:[%s191 + $0xcb] sm:$0xff]
      %v346 = vld [vmem:[%s191 + $0xd3] sm:$0xff]
      %v347 = vld [vmem:[%s191 + $0xdb] sm:$0xff]
      %v348 = vld [vmem:[%s191 + $0xe3] sm:$0xff]
      %v349 = vld [vmem:[%s191 + $0xeb] sm:$0xff]
      %v350 = vld [vmem:[%s191 + $0xf3] sm:$0xff]
      %v351 = vld [vmem:[%s191 + $0xfb] sm:$0xff]
      %v352 = vld [vmem:[%s191 + $0x103] sm:$0xff]
      %v353 = vld [vmem:[%s191 + $0x10b] sm:$0xff]
      %v354 = vld [vmem:[%s191 + $0x113] sm:$0xff]
      %v355 = vld [vmem:[%s191 + $0x11b] sm:$0xff]
      %v356 = vld [vmem:[%s191 + $0x123] sm:$0xff]
      %v357 = vld [vmem:[%s191 + $0x12b] sm:$0xff]
      %v358 = vld [vmem:[%s191 + $0x133] sm:$0xff]
      %v359 = vld [vmem:[%s191 + $0x13b] sm:$0xff]
      %v360 = vld [vmem:[%s191 + $0x143] sm:$0xff]
      %v361 = vld [vmem:[%s191 + $0x14b] sm:$0xff]
      %v362 = vld [vmem:[%s191 + $0x153] sm:$0xff]
      %v363 = vld [vmem:[%s191 + $0x14] sm:$0xff]
      %v364 = vld [vmem:[%s191 + $0x1c] sm:$0xff]
      %v365 = vld [vmem:[%s191 + $0x24] sm:$0xff]
      %v366 = vld [vmem:[%s191 + $0x2c] sm:$0xff]
      %v367 = vld [vmem:[%s191 + $0x34] sm:$0xff]
      %v368 = vld [vmem:[%s191 + $0x3c] sm:$0xff]
      %v369 = vld [vmem:[%s191 + $0x44] sm:$0xff]
      %v370 = vld [vmem:[%s191 + $0x4c] sm:$0xff]
      %v371 = vld [vmem:[%s191 + $0x54] sm:$0xff]
      %v372 = vld [vmem:[%s191 + $0x5c] sm:$0xff]
      %v373 = vld [vmem:[%s191 + $0x64] sm:$0xff]
      %v374 = vld [vmem:[%s191 + $0x6c] sm:$0xff]
      %v375 = vld [vmem:[%s191 + $0x74] sm:$0xff]
      %v376 = vld [vmem:[%s191 + $0x7c] sm:$0xff]
      %v377 = vld [vmem:[%s191 + $0x84] sm:$0xff]
      %v378 = vld [vmem:[%s191 + $0x8c] sm:$0xff]
      %v379 = vld [vmem:[%s191 + $0x94] sm:$0xff]
      %v380 = vld [vmem:[%s191 + $0x9c] sm:$0xff]
      %v381 = vld [vmem:[%s191 + $0xa4] sm:$0xff]
      %v382 = vld [vmem:[%s191 + $0xac] sm:$0xff]
      %v383 = vld [vmem:[%s191 + $0xb4] sm:$0xff]
      %v384 = vld [vmem:[%s191 + $0xbc] sm:$0xff]
      %v385 = vld [vmem:[%s191 + $0xc4] sm:$0xff]
      %v386 = vld [vmem:[%s191 + $0xcc] sm:$0xff]
      %v387 = vld [vmem:[%s191 + $0xd4] sm:$0xff]
      %v388 = vld [vmem:[%s191 + $0xdc] sm:$0xff]
      %v389 = vld [vmem:[%s191 + $0xe4] sm:$0xff]
      %v390 = vld [vmem:[%s191 + $0xec] sm:$0xff]
      %v391 = vld [vmem:[%s191 + $0xf4] sm:$0xff]
      %v392 = vld [vmem:[%s191 + $0xfc] sm:$0xff]
      %v393 = vld [vmem:[%s191 + $0x104] sm:$0xff]
      %v394 = vld [vmem:[%s191 + $0x10c] sm:$0xff]
      %v395 = vld [vmem:[%s191 + $0x114] sm:$0xff]
      %v396 = vld [vmem:[%s191 + $0x11c] sm:$0xff]
      %v397 = vld [vmem:[%s191 + $0x124] sm:$0xff]
      %v398 = vld [vmem:[%s191 + $0x12c] sm:$0xff]
      %v399 = vld [vmem:[%s191 + $0x134] sm:$0xff]
      %v400 = vld [vmem:[%s191 + $0x13c] sm:$0xff]
      %v401 = vld [vmem:[%s191 + $0x144] sm:$0xff]
      %v402 = vld [vmem:[%s191 + $0x14c] sm:$0xff]
      %v403 = vld [vmem:[%s191 + $0x154] sm:$0xff]
      %v404 = vld [vmem:[%s191 + $0x15c] sm:$0xff]
      %v405 = vld [vmem:[%s191 + $0x164] sm:$0xff]
      %v406 = vld [vmem:[%s191 + $0x25] sm:$0xff]
      %v407 = vld [vmem:[%s191 + $0x2d] sm:$0xff]
      %v408 = vld [vmem:[%s191 + $0x35] sm:$0xff]
      %v409 = vld [vmem:[%s191 + $0x3d] sm:$0xff]
      %v410 = vld [vmem:[%s191 + $0x45] sm:$0xff]
      %v411 = vld [vmem:[%s191 + $0x4d] sm:$0xff]
      %v412 = vld [vmem:[%s191 + $0x55] sm:$0xff]
      %v413 = vld [vmem:[%s191 + $0x5d] sm:$0xff]
      %v414 = vld [vmem:[%s191 + $0x65] sm:$0xff]
      %v415 = vld [vmem:[%s191 + $0x6d] sm:$0xff]
      %v416 = vld [vmem:[%s191 + $0x75] sm:$0xff]
      %v417 = vld [vmem:[%s191 + $0x7d] sm:$0xff]
      %v418 = vld [vmem:[%s191 + $0x85] sm:$0xff]
      %v419 = vld [vmem:[%s191 + $0x8d] sm:$0xff]
      %v420 = vld [vmem:[%s191 + $0x95] sm:$0xff]
      %v421 = vld [vmem:[%s191 + $0x9d] sm:$0xff]
      %v422 = vld [vmem:[%s191 + $0xa5] sm:$0xff]
      %v423 = vld [vmem:[%s191 + $0xad] sm:$0xff]
      %v424 = vld [vmem:[%s191 + $0xb5] sm:$0xff]
      %v425 = vld [vmem:[%s191 + $0xbd] sm:$0xff]
      %v426 = vld [vmem:[%s191 + $0xc5] sm:$0xff]
      %v427 = vld [vmem:[%s191 + $0xcd] sm:$0xff]
      %v428 = vld [vmem:[%s191 + $0xd5] sm:$0xff]
      %v429 = vld [vmem:[%s191 + $0xdd] sm:$0xff]
      %v430 = vld [vmem:[%s191 + $0xe5] sm:$0xff]
      %v431 = vld [vmem:[%s191 + $0xed] sm:$0xff]
      %v432 = vld [vmem:[%s191 + $0xf5] sm:$0xff]
      %v433 = vld [vmem:[%s191 + $0xfd] sm:$0xff]
      %v434 = vld [vmem:[%s191 + $0x105] sm:$0xff]
      %v435 = vld [vmem:[%s191 + $0x10d] sm:$0xff]
      %v436 = vld [vmem:[%s191 + $0x115] sm:$0xff]
      %v437 = vld [vmem:[%s191 + $0x11d] sm:$0xff]
      %v438 = vld [vmem:[%s191 + $0x125] sm:$0xff]
      %v439 = vld [vmem:[%s191 + $0x12d] sm:$0xff]
      %v440 = vld [vmem:[%s191 + $0x135] sm:$0xff]
      %v441 = vld [vmem:[%s191 + $0x13d] sm:$0xff]
      %v442 = vld [vmem:[%s191 + $0x145] sm:$0xff]
      %v443 = vld [vmem:[%s191 + $0x14d] sm:$0xff]
      %v444 = vld [vmem:[%s191 + $0x155] sm:$0xff]
      %v445 = vld [vmem:[%s191 + $0x15d] sm:$0xff]
      %v446 = vld [vmem:[%s191 + $0x165] sm:$0xff]
      %v447 = vld [vmem:[%s191 + $0x26] sm:$0xff]
      %v448 = vld [vmem:[%s191 + $0x2e] sm:$0xff]
      %v449 = vld [vmem:[%s191 + $0x36] sm:$0xff]
      %v450 = vld [vmem:[%s191 + $0x3e] sm:$0xff]
      %v451 = vld [vmem:[%s191 + $0x46] sm:$0xff]
      %v452 = vld [vmem:[%s191 + $0x4e] sm:$0xff]
      %v453 = vld [vmem:[%s191 + $0x56] sm:$0xff]
      %v454 = vld [vmem:[%s191 + $0x5e] sm:$0xff]
      %v455 = vld [vmem:[%s191 + $0x66] sm:$0xff]
      %v456 = vld [vmem:[%s191 + $0x6e] sm:$0xff]
      %v457 = vld [vmem:[%s191 + $0x76] sm:$0xff]
      %v458 = vld [vmem:[%s191 + $0x7e] sm:$0xff]
      %v459 = vld [vmem:[%s191 + $0x86] sm:$0xff]
      %v460 = vld [vmem:[%s191 + $0x8e] sm:$0xff]
      %v461 = vld [vmem:[%s191 + $0x96] sm:$0xff]
      %v462 = vld [vmem:[%s191 + $0x9e] sm:$0xff]
      %v463 = vld [vmem:[%s191 + $0xa6] sm:$0xff]
      %v464 = vld [vmem:[%s191 + $0xae] sm:$0xff]
      %v465 = vld [vmem:[%s191 + $0xb6] sm:$0xff]
      %v466 = vld [vmem:[%s191 + $0xbe] sm:$0xff]
      %v467 = vld [vmem:[%s191 + $0xc6] sm:$0xff]
      %v468 = vld [vmem:[%s191 + $0xce] sm:$0xff]
      %v469 = vld [vmem:[%s191 + $0xd6] sm:$0xff]
      %v470 = vld [vmem:[%s191 + $0xde] sm:$0xff]
      %v471 = vld [vmem:[%s191 + $0xe6] sm:$0xff]
      %v472 = vld [vmem:[%s191 + $0xee] sm:$0xff]
      %v473 = vld [vmem:[%s191 + $0xf6] sm:$0xff]
      %v474 = vld [vmem:[%s191 + $0xfe] sm:$0xff]
      %v475 = vld [vmem:[%s191 + $0x106] sm:$0xff]
      %v476 = vld [vmem:[%s191 + $0x10e] sm:$0xff]
      %v477 = vld [vmem:[%s191 + $0x116] sm:$0xff]
      %v478 = vld [vmem:[%s191 + $0x11e] sm:$0xff]
      %v479 = vld [vmem:[%s191 + $0x126] sm:$0xff]
      %v480 = vld [vmem:[%s191 + $0x12e] sm:$0xff]
      %v481 = vld [vmem:[%s191 + $0x136] sm:$0xff]
      %v482 = vld [vmem:[%s191 + $0x13e] sm:$0xff]
      %v483 = vld [vmem:[%s191 + $0x146] sm:$0xff]
      %v484 = vld [vmem:[%s191 + $0x14e] sm:$0xff]
      %v485 = vld [vmem:[%s191 + $0x156] sm:$0xff]
      %v486 = vld [vmem:[%s191 + $0x15e] sm:$0xff]
      %v487 = vld [vmem:[%s191 + $0x166] sm:$0xff]
      %529 = vrot.lane.b32.xlu0 %v238, 4
      %v530 = vpop.permute.xlu0 %529
      %531 = vrot.lane.b32.xlu0 %v239, 4
      %v532 = vpop.permute.xlu0 %531
      %533 = vrot.lane.b32.xlu0 %v240, 4
      %v534 = vpop.permute.xlu0 %533
      %535 = vrot.lane.b32.xlu0 %v241, 4
      %v536 = vpop.permute.xlu0 %535
      %537 = vrot.lane.b32.xlu0 %v242, 4
      %v538 = vpop.permute.xlu0 %537
      %539 = vrot.lane.b32.xlu0 %v243, 4
      %v540 = vpop.permute.xlu0 %539
      %541 = vrot.lane.b32.xlu0 %v244, 4
      %v542 = vpop.permute.xlu0 %541
      %543 = vrot.lane.b32.xlu0 %v245, 4
      %v544 = vpop.permute.xlu0 %543
      %545 = vrot.lane.b32.xlu0 %v246, 4
      %v546 = vpop.permute.xlu0 %545
      %547 = vrot.lane.b32.xlu0 %v247, 4
      %v548 = vpop.permute.xlu0 %547
      %549 = vrot.lane.b32.xlu0 %v248, 4
      %v550 = vpop.permute.xlu0 %549
      %551 = vrot.lane.b32.xlu0 %v249, 4
      %v552 = vpop.permute.xlu0 %551
      %553 = vrot.lane.b32.xlu0 %v250, 4
      %v554 = vpop.permute.xlu0 %553
      %555 = vrot.lane.b32.xlu0 %v251, 4
      %v556 = vpop.permute.xlu0 %555
      %557 = vrot.lane.b32.xlu0 %v252, 4
      %v558 = vpop.permute.xlu0 %557
      %559 = vrot.lane.b32.xlu0 %v253, 4
      %v560 = vpop.permute.xlu0 %559
      %561 = vrot.lane.b32.xlu0 %v254, 4
      %v562 = vpop.permute.xlu0 %561
      %563 = vrot.lane.b32.xlu0 %v255, 4
      %v564 = vpop.permute.xlu0 %563
      %565 = vrot.lane.b32.xlu0 %v256, 4
      %v566 = vpop.permute.xlu0 %565
      %567 = vrot.lane.b32.xlu0 %v257, 4
      %v568 = vpop.permute.xlu0 %567
      %569 = vrot.lane.b32.xlu0 %v258, 4
      %v570 = vpop.permute.xlu0 %569
      %571 = vrot.lane.b32.xlu0 %v259, 4
      %v572 = vpop.permute.xlu0 %571
      %573 = vrot.lane.b32.xlu0 %v260, 4
      %v574 = vpop.permute.xlu0 %573
      %575 = vrot.lane.b32.xlu0 %v261, 4
      %v576 = vpop.permute.xlu0 %575
      %577 = vrot.lane.b32.xlu0 %v262, 4
      %v578 = vpop.permute.xlu0 %577
      %579 = vrot.lane.b32.xlu0 %v263, 4
      %v580 = vpop.permute.xlu0 %579
      %581 = vrot.lane.b32.xlu0 %v264, 4
      %v582 = vpop.permute.xlu0 %581
      %583 = vrot.lane.b32.xlu0 %v265, 4
      %v584 = vpop.permute.xlu0 %583
      %585 = vrot.lane.b32.xlu0 %v266, 4
      %v586 = vpop.permute.xlu0 %585
      %587 = vrot.lane.b32.xlu0 %v267, 4
      %v588 = vpop.permute.xlu0 %587
      %589 = vrot.lane.b32.xlu0 %v268, 4
      %v590 = vpop.permute.xlu0 %589
      %591 = vrot.lane.b32.xlu0 %v269, 4
      %v592 = vpop.permute.xlu0 %591
      %593 = vrot.lane.b32.xlu0 %v270, 4
      %v594 = vpop.permute.xlu0 %593
      %595 = vrot.lane.b32.xlu0 %v271, 4
      %v596 = vpop.permute.xlu0 %595
      %597 = vrot.lane.b32.xlu0 %v272, 4
      %v598 = vpop.permute.xlu0 %597
      %599 = vrot.lane.b32.xlu0 %v273, 4
      %v600 = vpop.permute.xlu0 %599
      %601 = vrot.lane.b32.xlu0 %v274, 4
      %v602 = vpop.permute.xlu0 %601
      %603 = vrot.lane.b32.xlu0 %v275, 4
      %v604 = vpop.permute.xlu0 %603
      %605 = vrot.lane.b32.xlu0 %v276, 4
      %v606 = vpop.permute.xlu0 %605
      %607 = vrot.lane.b32.xlu0 %v277, 4
      %v608 = vpop.permute.xlu0 %607
      %609 = vrot.lane.b32.xlu0 %v278, 4
      %v610 = vpop.permute.xlu0 %609
      %693 = vrot.lane.b32.xlu0 %v279, 8
      %v694 = vpop.permute.xlu0 %693
      %695 = vrot.lane.b32.xlu0 %v280, 8
      %v696 = vpop.permute.xlu0 %695
      %697 = vrot.lane.b32.xlu0 %v281, 8
      %v698 = vpop.permute.xlu0 %697
      %699 = vrot.lane.b32.xlu0 %v282, 8
      %v700 = vpop.permute.xlu0 %699
      %701 = vrot.lane.b32.xlu0 %v283, 8
      %v702 = vpop.permute.xlu0 %701
      %703 = vrot.lane.b32.xlu0 %v284, 8
      %v704 = vpop.permute.xlu0 %703
      %705 = vrot.lane.b32.xlu0 %v285, 8
      %v706 = vpop.permute.xlu0 %705
      %707 = vrot.lane.b32.xlu0 %v286, 8
      %v708 = vpop.permute.xlu0 %707
      %709 = vrot.lane.b32.xlu0 %v287, 8
      %v710 = vpop.permute.xlu0 %709
      %711 = vrot.lane.b32.xlu0 %v288, 8
      %v712 = vpop.permute.xlu0 %711
      %713 = vrot.lane.b32.xlu0 %v289, 8
      %v714 = vpop.permute.xlu0 %713
      %715 = vrot.lane.b32.xlu0 %v290, 8
      %v716 = vpop.permute.xlu0 %715
      %717 = vrot.lane.b32.xlu0 %v291, 8
      %v718 = vpop.permute.xlu0 %717
      %719 = vrot.lane.b32.xlu0 %v292, 8
      %v720 = vpop.permute.xlu0 %719
      %721 = vrot.lane.b32.xlu0 %v293, 8
      %v722 = vpop.permute.xlu0 %721
      %723 = vrot.lane.b32.xlu0 %v294, 8
      %v724 = vpop.permute.xlu0 %723
      %725 = vrot.lane.b32.xlu0 %v295, 8
      %v726 = vpop.permute.xlu0 %725
      %727 = vrot.lane.b32.xlu0 %v296, 8
      %v728 = vpop.permute.xlu0 %727
      %729 = vrot.lane.b32.xlu0 %v297, 8
      %v730 = vpop.permute.xlu0 %729
      %731 = vrot.lane.b32.xlu0 %v298, 8
      %v732 = vpop.permute.xlu0 %731
      %733 = vrot.lane.b32.xlu0 %v299, 8
      %v734 = vpop.permute.xlu0 %733
      %735 = vrot.lane.b32.xlu0 %v300, 8
      %v736 = vpop.permute.xlu0 %735
      %737 = vrot.lane.b32.xlu0 %v301, 8
      %v738 = vpop.permute.xlu0 %737
      %739 = vrot.lane.b32.xlu0 %v302, 8
      %v740 = vpop.permute.xlu0 %739
      %741 = vrot.lane.b32.xlu0 %v303, 8
      %v742 = vpop.permute.xlu0 %741
      %743 = vrot.lane.b32.xlu0 %v304, 8
      %v744 = vpop.permute.xlu0 %743
      %745 = vrot.lane.b32.xlu0 %v305, 8
      %v746 = vpop.permute.xlu0 %745
      %747 = vrot.lane.b32.xlu0 %v306, 8
      %v748 = vpop.permute.xlu0 %747
      %749 = vrot.lane.b32.xlu0 %v307, 8
      %v750 = vpop.permute.xlu0 %749
      %751 = vrot.lane.b32.xlu0 %v308, 8
      %v752 = vpop.permute.xlu0 %751
      %753 = vrot.lane.b32.xlu0 %v309, 8
      %v754 = vpop.permute.xlu0 %753
      %755 = vrot.lane.b32.xlu0 %v310, 8
      %v756 = vpop.permute.xlu0 %755
      %757 = vrot.lane.b32.xlu0 %v311, 8
      %v758 = vpop.permute.xlu0 %757
      %759 = vrot.lane.b32.xlu0 %v312, 8
      %v760 = vpop.permute.xlu0 %759
      %761 = vrot.lane.b32.xlu0 %v313, 8
      %v762 = vpop.permute.xlu0 %761
      %763 = vrot.lane.b32.xlu0 %v314, 8
      %v764 = vpop.permute.xlu0 %763
      %765 = vrot.lane.b32.xlu0 %v315, 8
      %v766 = vpop.permute.xlu0 %765
      %767 = vrot.lane.b32.xlu0 %v316, 8
      %v768 = vpop.permute.xlu0 %767
      %769 = vrot.lane.b32.xlu0 %v317, 8
      %v770 = vpop.permute.xlu0 %769
      %771 = vrot.lane.b32.xlu0 %v318, 8
      %v772 = vpop.permute.xlu0 %771
      %773 = vrot.lane.b32.xlu0 %v319, 8
      %v774 = vpop.permute.xlu0 %773
      %818 = vrot.lane.b32.xlu0 %v281, 12
      %v819 = vpop.permute.xlu0 %818
      %820 = vrot.lane.b32.xlu0 %v282, 12
      %v821 = vpop.permute.xlu0 %820
      %822 = vrot.lane.b32.xlu0 %v283, 12
      %v823 = vpop.permute.xlu0 %822
      %824 = vrot.lane.b32.xlu0 %v284, 12
      %v825 = vpop.permute.xlu0 %824
      %826 = vrot.lane.b32.xlu0 %v285, 12
      %v827 = vpop.permute.xlu0 %826
      %828 = vrot.lane.b32.xlu0 %v286, 12
      %v829 = vpop.permute.xlu0 %828
      %830 = vrot.lane.b32.xlu0 %v287, 12
      %v831 = vpop.permute.xlu0 %830
      %832 = vrot.lane.b32.xlu0 %v288, 12
      %v833 = vpop.permute.xlu0 %832
      %834 = vrot.lane.b32.xlu0 %v289, 12
      %v835 = vpop.permute.xlu0 %834
      %836 = vrot.lane.b32.xlu0 %v290, 12
      %v837 = vpop.permute.xlu0 %836
      %838 = vrot.lane.b32.xlu0 %v291, 12
      %v839 = vpop.permute.xlu0 %838
      %840 = vrot.lane.b32.xlu0 %v292, 12
      %v841 = vpop.permute.xlu0 %840
      %842 = vrot.lane.b32.xlu0 %v293, 12
      %v843 = vpop.permute.xlu0 %842
      %844 = vrot.lane.b32.xlu0 %v294, 12
      %v845 = vpop.permute.xlu0 %844
      %846 = vrot.lane.b32.xlu0 %v295, 12
      %v847 = vpop.permute.xlu0 %846
      %848 = vrot.lane.b32.xlu0 %v296, 12
      %v849 = vpop.permute.xlu0 %848
      %850 = vrot.lane.b32.xlu0 %v297, 12
      %v851 = vpop.permute.xlu0 %850
      %852 = vrot.lane.b32.xlu0 %v298, 12
      %v853 = vpop.permute.xlu0 %852
      %854 = vrot.lane.b32.xlu0 %v299, 12
      %v855 = vpop.permute.xlu0 %854
      %856 = vrot.lane.b32.xlu0 %v300, 12
      %v857 = vpop.permute.xlu0 %856
      %858 = vrot.lane.b32.xlu0 %v301, 12
      %v859 = vpop.permute.xlu0 %858
      %860 = vrot.lane.b32.xlu0 %v302, 12
      %v861 = vpop.permute.xlu0 %860
      %862 = vrot.lane.b32.xlu0 %v303, 12
      %v863 = vpop.permute.xlu0 %862
      %864 = vrot.lane.b32.xlu0 %v304, 12
      %v865 = vpop.permute.xlu0 %864
      %866 = vrot.lane.b32.xlu0 %v305, 12
      %v867 = vpop.permute.xlu0 %866
      %868 = vrot.lane.b32.xlu0 %v306, 12
      %v869 = vpop.permute.xlu0 %868
      %870 = vrot.lane.b32.xlu0 %v307, 12
      %v871 = vpop.permute.xlu0 %870
      %872 = vrot.lane.b32.xlu0 %v308, 12
      %v873 = vpop.permute.xlu0 %872
      %874 = vrot.lane.b32.xlu0 %v309, 12
      %v875 = vpop.permute.xlu0 %874
      %876 = vrot.lane.b32.xlu0 %v310, 12
      %v877 = vpop.permute.xlu0 %876
      %878 = vrot.lane.b32.xlu0 %v311, 12
      %v879 = vpop.permute.xlu0 %878
      %880 = vrot.lane.b32.xlu0 %v312, 12
      %v881 = vpop.permute.xlu0 %880
      %882 = vrot.lane.b32.xlu0 %v313, 12
      %v883 = vpop.permute.xlu0 %882
      %884 = vrot.lane.b32.xlu0 %v314, 12
      %v885 = vpop.permute.xlu0 %884
      %886 = vrot.lane.b32.xlu0 %v315, 12
      %v887 = vpop.permute.xlu0 %886
      %888 = vrot.lane.b32.xlu0 %v316, 12
      %v889 = vpop.permute.xlu0 %888
      %890 = vrot.lane.b32.xlu0 %v317, 12
      %v891 = vpop.permute.xlu0 %890
      %892 = vrot.lane.b32.xlu0 %v318, 12
      %v893 = vpop.permute.xlu0 %892
      %894 = vrot.lane.b32.xlu0 %v319, 12
      %v895 = vpop.permute.xlu0 %894
      %896 = vrot.lane.b32.xlu0 %v320, 12
      %v897 = vpop.permute.xlu0 %896
      %898 = vrot.lane.b32.xlu0 %v321, 12
      %v899 = vpop.permute.xlu0 %898
      %982 = vrot.lane.b32.xlu0 %v322, 16
      %v983 = vpop.permute.xlu0 %982
      %984 = vrot.lane.b32.xlu0 %v323, 16
      %v985 = vpop.permute.xlu0 %984
      %986 = vrot.lane.b32.xlu0 %v324, 16
      %v987 = vpop.permute.xlu0 %986
      %988 = vrot.lane.b32.xlu0 %v325, 16
      %v989 = vpop.permute.xlu0 %988
      %990 = vrot.lane.b32.xlu0 %v326, 16
      %v991 = vpop.permute.xlu0 %990
      %992 = vrot.lane.b32.xlu0 %v327, 16
      %v993 = vpop.permute.xlu0 %992
      %994 = vrot.lane.b32.xlu0 %v328, 16
      %v995 = vpop.permute.xlu0 %994
      %996 = vrot.lane.b32.xlu0 %v329, 16
      %v997 = vpop.permute.xlu0 %996
      %998 = vrot.lane.b32.xlu0 %v330, 16
      %v999 = vpop.permute.xlu0 %998
      %1000 = vrot.lane.b32.xlu0 %v331, 16
      %v1001 = vpop.permute.xlu0 %1000
      %1002 = vrot.lane.b32.xlu0 %v332, 16
      %v1003 = vpop.permute.xlu0 %1002
      %1004 = vrot.lane.b32.xlu0 %v333, 16
      %v1005 = vpop.permute.xlu0 %1004
      %1006 = vrot.lane.b32.xlu0 %v334, 16
      %v1007 = vpop.permute.xlu0 %1006
      %1008 = vrot.lane.b32.xlu0 %v335, 16
      %v1009 = vpop.permute.xlu0 %1008
      %1010 = vrot.lane.b32.xlu0 %v336, 16
      %v1011 = vpop.permute.xlu0 %1010
      %1012 = vrot.lane.b32.xlu0 %v337, 16
      %v1013 = vpop.permute.xlu0 %1012
      %1014 = vrot.lane.b32.xlu0 %v338, 16
      %v1015 = vpop.permute.xlu0 %1014
      %1016 = vrot.lane.b32.xlu0 %v339, 16
      %v1017 = vpop.permute.xlu0 %1016
      %1018 = vrot.lane.b32.xlu0 %v340, 16
      %v1019 = vpop.permute.xlu0 %1018
      %1020 = vrot.lane.b32.xlu0 %v341, 16
      %v1021 = vpop.permute.xlu0 %1020
      %1022 = vrot.lane.b32.xlu0 %v342, 16
      %v1023 = vpop.permute.xlu0 %1022
      %1024 = vrot.lane.b32.xlu0 %v343, 16
      %v1025 = vpop.permute.xlu0 %1024
      %1026 = vrot.lane.b32.xlu0 %v344, 16
      %v1027 = vpop.permute.xlu0 %1026
      %1028 = vrot.lane.b32.xlu0 %v345, 16
      %v1029 = vpop.permute.xlu0 %1028
      %1030 = vrot.lane.b32.xlu0 %v346, 16
      %v1031 = vpop.permute.xlu0 %1030
      %1032 = vrot.lane.b32.xlu0 %v347, 16
      %v1033 = vpop.permute.xlu0 %1032
      %1034 = vrot.lane.b32.xlu0 %v348, 16
      %v1035 = vpop.permute.xlu0 %1034
      %1036 = vrot.lane.b32.xlu0 %v349, 16
      %v1037 = vpop.permute.xlu0 %1036
      %1038 = vrot.lane.b32.xlu0 %v350, 16
      %v1039 = vpop.permute.xlu0 %1038
      %1040 = vrot.lane.b32.xlu0 %v351, 16
      %v1041 = vpop.permute.xlu0 %1040
      %1042 = vrot.lane.b32.xlu0 %v352, 16
      %v1043 = vpop.permute.xlu0 %1042
      %1044 = vrot.lane.b32.xlu0 %v353, 16
      %v1045 = vpop.permute.xlu0 %1044
      %1046 = vrot.lane.b32.xlu0 %v354, 16
      %v1047 = vpop.permute.xlu0 %1046
      %1048 = vrot.lane.b32.xlu0 %v355, 16
      %v1049 = vpop.permute.xlu0 %1048
      %1050 = vrot.lane.b32.xlu0 %v356, 16
      %v1051 = vpop.permute.xlu0 %1050
      %1052 = vrot.lane.b32.xlu0 %v357, 16
      %v1053 = vpop.permute.xlu0 %1052
      %1054 = vrot.lane.b32.xlu0 %v358, 16
      %v1055 = vpop.permute.xlu0 %1054
      %1056 = vrot.lane.b32.xlu0 %v359, 16
      %v1057 = vpop.permute.xlu0 %1056
      %1058 = vrot.lane.b32.xlu0 %v360, 16
      %v1059 = vpop.permute.xlu0 %1058
      %1060 = vrot.lane.b32.xlu0 %v361, 16
      %v1061 = vpop.permute.xlu0 %1060
      %1062 = vrot.lane.b32.xlu0 %v362, 16
      %v1063 = vpop.permute.xlu0 %1062
      %1146 = vrot.lane.b32.xlu0 %v363, 20
      %v1147 = vpop.permute.xlu0 %1146
      %1148 = vrot.lane.b32.xlu0 %v364, 20
      %v1149 = vpop.permute.xlu0 %1148
      %1150 = vrot.lane.b32.xlu0 %v365, 20
      %v1151 = vpop.permute.xlu0 %1150
      %1152 = vrot.lane.b32.xlu0 %v366, 20
      %v1153 = vpop.permute.xlu0 %1152
      %1154 = vrot.lane.b32.xlu0 %v367, 20
      %v1155 = vpop.permute.xlu0 %1154
      %1156 = vrot.lane.b32.xlu0 %v368, 20
      %v1157 = vpop.permute.xlu0 %1156
      %1158 = vrot.lane.b32.xlu0 %v369, 20
      %v1159 = vpop.permute.xlu0 %1158
      %1160 = vrot.lane.b32.xlu0 %v370, 20
      %v1161 = vpop.permute.xlu0 %1160
      %1162 = vrot.lane.b32.xlu0 %v371, 20
      %v1163 = vpop.permute.xlu0 %1162
      %1164 = vrot.lane.b32.xlu0 %v372, 20
      %v1165 = vpop.permute.xlu0 %1164
      %1166 = vrot.lane.b32.xlu0 %v373, 20
      %v1167 = vpop.permute.xlu0 %1166
      %1168 = vrot.lane.b32.xlu0 %v374, 20
      %v1169 = vpop.permute.xlu0 %1168
      %1170 = vrot.lane.b32.xlu0 %v375, 20
      %v1171 = vpop.permute.xlu0 %1170
      %1172 = vrot.lane.b32.xlu0 %v376, 20
      %v1173 = vpop.permute.xlu0 %1172
      %1174 = vrot.lane.b32.xlu0 %v377, 20
      %v1175 = vpop.permute.xlu0 %1174
      %1176 = vrot.lane.b32.xlu0 %v378, 20
      %v1177 = vpop.permute.xlu0 %1176
      %1178 = vrot.lane.b32.xlu0 %v379, 20
      %v1179 = vpop.permute.xlu0 %1178
      %1180 = vrot.lane.b32.xlu0 %v380, 20
      %v1181 = vpop.permute.xlu0 %1180
      %1182 = vrot.lane.b32.xlu0 %v381, 20
      %v1183 = vpop.permute.xlu0 %1182
      %1184 = vrot.lane.b32.xlu0 %v382, 20
      %v1185 = vpop.permute.xlu0 %1184
      %1186 = vrot.lane.b32.xlu0 %v383, 20
      %v1187 = vpop.permute.xlu0 %1186
      %1188 = vrot.lane.b32.xlu0 %v384, 20
      %v1189 = vpop.permute.xlu0 %1188
      %1190 = vrot.lane.b32.xlu0 %v385, 20
      %v1191 = vpop.permute.xlu0 %1190
      %1192 = vrot.lane.b32.xlu0 %v386, 20
      %v1193 = vpop.permute.xlu0 %1192
      %1194 = vrot.lane.b32.xlu0 %v387, 20
      %v1195 = vpop.permute.xlu0 %1194
      %1196 = vrot.lane.b32.xlu0 %v388, 20
      %v1197 = vpop.permute.xlu0 %1196
      %1198 = vrot.lane.b32.xlu0 %v389, 20
      %v1199 = vpop.permute.xlu0 %1198
      %1200 = vrot.lane.b32.xlu0 %v390, 20
      %v1201 = vpop.permute.xlu0 %1200
      %1202 = vrot.lane.b32.xlu0 %v391, 20
      %v1203 = vpop.permute.xlu0 %1202
      %1204 = vrot.lane.b32.xlu0 %v392, 20
      %v1205 = vpop.permute.xlu0 %1204
      %1206 = vrot.lane.b32.xlu0 %v393, 20
      %v1207 = vpop.permute.xlu0 %1206
      %1208 = vrot.lane.b32.xlu0 %v394, 20
      %v1209 = vpop.permute.xlu0 %1208
      %1210 = vrot.lane.b32.xlu0 %v395, 20
      %v1211 = vpop.permute.xlu0 %1210
      %1212 = vrot.lane.b32.xlu0 %v396, 20
      %v1213 = vpop.permute.xlu0 %1212
      %1214 = vrot.lane.b32.xlu0 %v397, 20
      %v1215 = vpop.permute.xlu0 %1214
      %1216 = vrot.lane.b32.xlu0 %v398, 20
      %v1217 = vpop.permute.xlu0 %1216
      %1218 = vrot.lane.b32.xlu0 %v399, 20
      %v1219 = vpop.permute.xlu0 %1218
      %1220 = vrot.lane.b32.xlu0 %v400, 20
      %v1221 = vpop.permute.xlu0 %1220
      %1222 = vrot.lane.b32.xlu0 %v401, 20
      %v1223 = vpop.permute.xlu0 %1222
      %1224 = vrot.lane.b32.xlu0 %v402, 20
      %v1225 = vpop.permute.xlu0 %1224
      %1226 = vrot.lane.b32.xlu0 %v403, 20
      %v1227 = vpop.permute.xlu0 %1226
      %1271 = vrot.lane.b32.xlu0 %v365, 24
      %v1272 = vpop.permute.xlu0 %1271
      %1273 = vrot.lane.b32.xlu0 %v366, 24
      %v1274 = vpop.permute.xlu0 %1273
      %1275 = vrot.lane.b32.xlu0 %v367, 24
      %v1276 = vpop.permute.xlu0 %1275
      %1277 = vrot.lane.b32.xlu0 %v368, 24
      %v1278 = vpop.permute.xlu0 %1277
      %1279 = vrot.lane.b32.xlu0 %v369, 24
      %v1280 = vpop.permute.xlu0 %1279
      %1281 = vrot.lane.b32.xlu0 %v370, 24
      %v1282 = vpop.permute.xlu0 %1281
      %1283 = vrot.lane.b32.xlu0 %v371, 24
      %v1284 = vpop.permute.xlu0 %1283
      %1285 = vrot.lane.b32.xlu0 %v372, 24
      %v1286 = vpop.permute.xlu0 %1285
      %1287 = vrot.lane.b32.xlu0 %v373, 24
      %v1288 = vpop.permute.xlu0 %1287
      %1289 = vrot.lane.b32.xlu0 %v374, 24
      %v1290 = vpop.permute.xlu0 %1289
      %1291 = vrot.lane.b32.xlu0 %v375, 24
      %v1292 = vpop.permute.xlu0 %1291
      %1293 = vrot.lane.b32.xlu0 %v376, 24
      %v1294 = vpop.permute.xlu0 %1293
      %1295 = vrot.lane.b32.xlu0 %v377, 24
      %v1296 = vpop.permute.xlu0 %1295
      %1297 = vrot.lane.b32.xlu0 %v378, 24
      %v1298 = vpop.permute.xlu0 %1297
      %1299 = vrot.lane.b32.xlu0 %v379, 24
      %v1300 = vpop.permute.xlu0 %1299
      %1301 = vrot.lane.b32.xlu0 %v380, 24
      %v1302 = vpop.permute.xlu0 %1301
      %1303 = vrot.lane.b32.xlu0 %v381, 24
      %v1304 = vpop.permute.xlu0 %1303
      %1305 = vrot.lane.b32.xlu0 %v382, 24
      %v1306 = vpop.permute.xlu0 %1305
      %1307 = vrot.lane.b32.xlu0 %v383, 24
      %v1308 = vpop.permute.xlu0 %1307
      %1309 = vrot.lane.b32.xlu0 %v384, 24
      %v1310 = vpop.permute.xlu0 %1309
      %1311 = vrot.lane.b32.xlu0 %v385, 24
      %v1312 = vpop.permute.xlu0 %1311
      %1313 = vrot.lane.b32.xlu0 %v386, 24
      %v1314 = vpop.permute.xlu0 %1313
      %1315 = vrot.lane.b32.xlu0 %v387, 24
      %v1316 = vpop.permute.xlu0 %1315
      %1317 = vrot.lane.b32.xlu0 %v388, 24
      %v1318 = vpop.permute.xlu0 %1317
      %1319 = vrot.lane.b32.xlu0 %v389, 24
      %v1320 = vpop.permute.xlu0 %1319
      %1321 = vrot.lane.b32.xlu0 %v390, 24
      %v1322 = vpop.permute.xlu0 %1321
      %1323 = vrot.lane.b32.xlu0 %v391, 24
      %v1324 = vpop.permute.xlu0 %1323
      %1325 = vrot.lane.b32.xlu0 %v392, 24
      %v1326 = vpop.permute.xlu0 %1325
      %1327 = vrot.lane.b32.xlu0 %v393, 24
      %v1328 = vpop.permute.xlu0 %1327
      %1329 = vrot.lane.b32.xlu0 %v394, 24
      %v1330 = vpop.permute.xlu0 %1329
      %1331 = vrot.lane.b32.xlu0 %v395, 24
      %v1332 = vpop.permute.xlu0 %1331
      %1333 = vrot.lane.b32.xlu0 %v396, 24
      %v1334 = vpop.permute.xlu0 %1333
      %1335 = vrot.lane.b32.xlu0 %v397, 24
      %v1336 = vpop.permute.xlu0 %1335
      %1337 = vrot.lane.b32.xlu0 %v398, 24
      %v1338 = vpop.permute.xlu0 %1337
      %1339 = vrot.lane.b32.xlu0 %v399, 24
      %v1340 = vpop.permute.xlu0 %1339
      %1341 = vrot.lane.b32.xlu0 %v400, 24
      %v1342 = vpop.permute.xlu0 %1341
      %1343 = vrot.lane.b32.xlu0 %v401, 24
      %v1344 = vpop.permute.xlu0 %1343
      %1345 = vrot.lane.b32.xlu0 %v402, 24
      %v1346 = vpop.permute.xlu0 %1345
      %1347 = vrot.lane.b32.xlu0 %v403, 24
      %v1348 = vpop.permute.xlu0 %1347
      %1349 = vrot.lane.b32.xlu0 %v404, 24
      %v1350 = vpop.permute.xlu0 %1349
      %1351 = vrot.lane.b32.xlu0 %v405, 24
      %v1352 = vpop.permute.xlu0 %1351
      %1435 = vrot.lane.b32.xlu0 %v406, 28
      %v1436 = vpop.permute.xlu0 %1435
      %1437 = vrot.lane.b32.xlu0 %v407, 28
      %v1438 = vpop.permute.xlu0 %1437
      %1439 = vrot.lane.b32.xlu0 %v408, 28
      %v1440 = vpop.permute.xlu0 %1439
      %1441 = vrot.lane.b32.xlu0 %v409, 28
      %v1442 = vpop.permute.xlu0 %1441
      %1443 = vrot.lane.b32.xlu0 %v410, 28
      %v1444 = vpop.permute.xlu0 %1443
      %1445 = vrot.lane.b32.xlu0 %v411, 28
      %v1446 = vpop.permute.xlu0 %1445
      %1447 = vrot.lane.b32.xlu0 %v412, 28
      %v1448 = vpop.permute.xlu0 %1447
      %1449 = vrot.lane.b32.xlu0 %v413, 28
      %v1450 = vpop.permute.xlu0 %1449
      %1451 = vrot.lane.b32.xlu0 %v414, 28
      %v1452 = vpop.permute.xlu0 %1451
      %1453 = vrot.lane.b32.xlu0 %v415, 28
      %v1454 = vpop.permute.xlu0 %1453
      %1455 = vrot.lane.b32.xlu0 %v416, 28
      %v1456 = vpop.permute.xlu0 %1455
      %1457 = vrot.lane.b32.xlu0 %v417, 28
      %v1458 = vpop.permute.xlu0 %1457
      %1459 = vrot.lane.b32.xlu0 %v418, 28
      %v1460 = vpop.permute.xlu0 %1459
      %1461 = vrot.lane.b32.xlu0 %v419, 28
      %v1462 = vpop.permute.xlu0 %1461
      %1463 = vrot.lane.b32.xlu0 %v420, 28
      %v1464 = vpop.permute.xlu0 %1463
      %1465 = vrot.lane.b32.xlu0 %v421, 28
      %v1466 = vpop.permute.xlu0 %1465
      %1467 = vrot.lane.b32.xlu0 %v422, 28
      %v1468 = vpop.permute.xlu0 %1467
      %1469 = vrot.lane.b32.xlu0 %v423, 28
      %v1470 = vpop.permute.xlu0 %1469
      %1471 = vrot.lane.b32.xlu0 %v424, 28
      %v1472 = vpop.permute.xlu0 %1471
      %1473 = vrot.lane.b32.xlu0 %v425, 28
      %v1474 = vpop.permute.xlu0 %1473
      %1475 = vrot.lane.b32.xlu0 %v426, 28
      %v1476 = vpop.permute.xlu0 %1475
      %1477 = vrot.lane.b32.xlu0 %v427, 28
      %v1478 = vpop.permute.xlu0 %1477
      %1479 = vrot.lane.b32.xlu0 %v428, 28
      %v1480 = vpop.permute.xlu0 %1479
      %1481 = vrot.lane.b32.xlu0 %v429, 28
      %v1482 = vpop.permute.xlu0 %1481
      %1483 = vrot.lane.b32.xlu0 %v430, 28
      %v1484 = vpop.permute.xlu0 %1483
      %1485 = vrot.lane.b32.xlu0 %v431, 28
      %v1486 = vpop.permute.xlu0 %1485
      %1487 = vrot.lane.b32.xlu0 %v432, 28
      %v1488 = vpop.permute.xlu0 %1487
      %1489 = vrot.lane.b32.xlu0 %v433, 28
      %v1490 = vpop.permute.xlu0 %1489
      %1491 = vrot.lane.b32.xlu0 %v434, 28
      %v1492 = vpop.permute.xlu0 %1491
      %1493 = vrot.lane.b32.xlu0 %v435, 28
      %v1494 = vpop.permute.xlu0 %1493
      %1495 = vrot.lane.b32.xlu0 %v436, 28
      %v1496 = vpop.permute.xlu0 %1495
      %1497 = vrot.lane.b32.xlu0 %v437, 28
      %v1498 = vpop.permute.xlu0 %1497
      %1499 = vrot.lane.b32.xlu0 %v438, 28
      %v1500 = vpop.permute.xlu0 %1499
      %1501 = vrot.lane.b32.xlu0 %v439, 28
      %v1502 = vpop.permute.xlu0 %1501
      %1503 = vrot.lane.b32.xlu0 %v440, 28
      %v1504 = vpop.permute.xlu0 %1503
      %1505 = vrot.lane.b32.xlu0 %v441, 28
      %v1506 = vpop.permute.xlu0 %1505
      %1507 = vrot.lane.b32.xlu0 %v442, 28
      %v1508 = vpop.permute.xlu0 %1507
      %1509 = vrot.lane.b32.xlu0 %v443, 28
      %v1510 = vpop.permute.xlu0 %1509
      %1511 = vrot.lane.b32.xlu0 %v444, 28
      %v1512 = vpop.permute.xlu0 %1511
      %1513 = vrot.lane.b32.xlu0 %v445, 28
      %v1514 = vpop.permute.xlu0 %1513
      %1515 = vrot.lane.b32.xlu0 %v446, 28
      %v1516 = vpop.permute.xlu0 %1515
      %1599 = vrot.lane.b32.xlu0 %v447, 32
      %v1600 = vpop.permute.xlu0 %1599
      %1601 = vrot.lane.b32.xlu0 %v448, 32
      %v1602 = vpop.permute.xlu0 %1601
      %1603 = vrot.lane.b32.xlu0 %v449, 32
      %v1604 = vpop.permute.xlu0 %1603
      %1605 = vrot.lane.b32.xlu0 %v450, 32
      %v1606 = vpop.permute.xlu0 %1605
      %1607 = vrot.lane.b32.xlu0 %v451, 32
      %v1608 = vpop.permute.xlu0 %1607
      %1609 = vrot.lane.b32.xlu0 %v452, 32
      %v1610 = vpop.permute.xlu0 %1609
      %1611 = vrot.lane.b32.xlu0 %v453, 32
      %v1612 = vpop.permute.xlu0 %1611
      %1613 = vrot.lane.b32.xlu0 %v454, 32
      %v1614 = vpop.permute.xlu0 %1613
      %1615 = vrot.lane.b32.xlu0 %v455, 32
      %v1616 = vpop.permute.xlu0 %1615
      %1617 = vrot.lane.b32.xlu0 %v456, 32
      %v1618 = vpop.permute.xlu0 %1617
      %1619 = vrot.lane.b32.xlu0 %v457, 32
      %v1620 = vpop.permute.xlu0 %1619
      %1621 = vrot.lane.b32.xlu0 %v458, 32
      %v1622 = vpop.permute.xlu0 %1621
      %1623 = vrot.lane.b32.xlu0 %v459, 32
      %v1624 = vpop.permute.xlu0 %1623
      %1625 = vrot.lane.b32.xlu0 %v460, 32
      %v1626 = vpop.permute.xlu0 %1625
      %1627 = vrot.lane.b32.xlu0 %v461, 32
      %v1628 = vpop.permute.xlu0 %1627
      %1629 = vrot.lane.b32.xlu0 %v462, 32
      %v1630 = vpop.permute.xlu0 %1629
      %1631 = vrot.lane.b32.xlu0 %v463, 32
      %v1632 = vpop.permute.xlu0 %1631
      %1633 = vrot.lane.b32.xlu0 %v464, 32
      %v1634 = vpop.permute.xlu0 %1633
      %1635 = vrot.lane.b32.xlu0 %v465, 32
      %v1636 = vpop.permute.xlu0 %1635
      %1637 = vrot.lane.b32.xlu0 %v466, 32
      %v1638 = vpop.permute.xlu0 %1637
      %1639 = vrot.lane.b32.xlu0 %v467, 32
      %v1640 = vpop.permute.xlu0 %1639
      %1641 = vrot.lane.b32.xlu0 %v468, 32
      %v1642 = vpop.permute.xlu0 %1641
      %1643 = vrot.lane.b32.xlu0 %v469, 32
      %v1644 = vpop.permute.xlu0 %1643
      %1645 = vrot.lane.b32.xlu0 %v470, 32
      %v1646 = vpop.permute.xlu0 %1645
      %1647 = vrot.lane.b32.xlu0 %v471, 32
      %v1648 = vpop.permute.xlu0 %1647
      %1649 = vrot.lane.b32.xlu0 %v472, 32
      %v1650 = vpop.permute.xlu0 %1649
      %1651 = vrot.lane.b32.xlu0 %v473, 32
      %v1652 = vpop.permute.xlu0 %1651
      %1653 = vrot.lane.b32.xlu0 %v474, 32
      %v1654 = vpop.permute.xlu0 %1653
      %1655 = vrot.lane.b32.xlu0 %v475, 32
      %v1656 = vpop.permute.xlu0 %1655
      %1657 = vrot.lane.b32.xlu0 %v476, 32
      %v1658 = vpop.permute.xlu0 %1657
      %1659 = vrot.lane.b32.xlu0 %v477, 32
      %v1660 = vpop.permute.xlu0 %1659
      %1661 = vrot.lane.b32.xlu0 %v478, 32
      %v1662 = vpop.permute.xlu0 %1661
      %1663 = vrot.lane.b32.xlu0 %v479, 32
      %v1664 = vpop.permute.xlu0 %1663
      %1665 = vrot.lane.b32.xlu0 %v480, 32
      %v1666 = vpop.permute.xlu0 %1665
      %1667 = vrot.lane.b32.xlu0 %v481, 32
      %v1668 = vpop.permute.xlu0 %1667
      %1669 = vrot.lane.b32.xlu0 %v482, 32
      %v1670 = vpop.permute.xlu0 %1669
      %1671 = vrot.lane.b32.xlu0 %v483, 32
      %v1672 = vpop.permute.xlu0 %1671
      %1673 = vrot.lane.b32.xlu0 %v484, 32
      %v1674 = vpop.permute.xlu0 %1673
      %1675 = vrot.lane.b32.xlu0 %v485, 32
      %v1676 = vpop.permute.xlu0 %1675
      %1677 = vrot.lane.b32.xlu0 %v486, 32
      %v1678 = vpop.permute.xlu0 %1677
      %1679 = vrot.lane.b32.xlu0 %v487, 32
      %v1680 = vpop.permute.xlu0 %1679
      %vm1722 = vcmask 31744
      %v1723 = vsel %vm1722, %v197, %v530
      %v1724 = vsel %vm1722, %v198, %v532
      %v1725 = vsel %vm1722, %v199, %v534
      %v1726 = vsel %vm1722, %v200, %v536
      %v1727 = vsel %vm1722, %v201, %v538
      %v1728 = vsel %vm1722, %v202, %v540
      %v1729 = vsel %vm1722, %v203, %v542
      %v1730 = vsel %vm1722, %v204, %v544
      %v1731 = vsel %vm1722, %v205, %v546
      %v1732 = vsel %vm1722, %v206, %v548
      %v1733 = vsel %vm1722, %v207, %v550
      %v1734 = vsel %vm1722, %v208, %v552
      %v1735 = vsel %vm1722, %v209, %v554
      %v1736 = vsel %vm1722, %v210, %v556
      %v1737 = vsel %vm1722, %v211, %v558
      %v1738 = vsel %vm1722, %v212, %v560
      %v1739 = vsel %vm1722, %v213, %v562
      %v1740 = vsel %vm1722, %v214, %v564
      %v1741 = vsel %vm1722, %v215, %v566
      %v1742 = vsel %vm1722, %v216, %v568
      %v1743 = vsel %vm1722, %v217, %v570
      %v1744 = vsel %vm1722, %v218, %v572
      %v1745 = vsel %vm1722, %v219, %v574
      %v1746 = vsel %vm1722, %v220, %v576
      %v1747 = vsel %vm1722, %v221, %v578
      %v1748 = vsel %vm1722, %v222, %v580
      %v1749 = vsel %vm1722, %v223, %v582
      %v1750 = vsel %vm1722, %v224, %v584
      %v1751 = vsel %vm1722, %v225, %v586
      %v1752 = vsel %vm1722, %v226, %v588
      %v1753 = vsel %vm1722, %v227, %v590
      %v1754 = vsel %vm1722, %v228, %v592
      %v1755 = vsel %vm1722, %v229, %v594
      %v1756 = vsel %vm1722, %v230, %v596
      %v1757 = vsel %vm1722, %v231, %v598
      %v1758 = vsel %vm1722, %v232, %v600
      %v1759 = vsel %vm1722, %v233, %v602
      %v1760 = vsel %vm1722, %v234, %v604
      %v1761 = vsel %vm1722, %v235, %v606
      %v1762 = vsel %vm1722, %v236, %v608
      %v1763 = vsel %vm1722, %v237, %v610
      %vm1764 = vcmask 64512
      %v1765 = vsel %vm1764, %v1723, %v694
      %v1766 = vsel %vm1764, %v1724, %v696
      %v1767 = vsel %vm1764, %v1725, %v698
      %v1768 = vsel %vm1764, %v1726, %v700
      %v1769 = vsel %vm1764, %v1727, %v702
      %v1770 = vsel %vm1764, %v1728, %v704
      %v1771 = vsel %vm1764, %v1729, %v706
      %v1772 = vsel %vm1764, %v1730, %v708
      %v1773 = vsel %vm1764, %v1731, %v710
      %v1774 = vsel %vm1764, %v1732, %v712
      %v1775 = vsel %vm1764, %v1733, %v714
      %v1776 = vsel %vm1764, %v1734, %v716
      %v1777 = vsel %vm1764, %v1735, %v718
      %v1778 = vsel %vm1764, %v1736, %v720
      %v1779 = vsel %vm1764, %v1737, %v722
      %v1780 = vsel %vm1764, %v1738, %v724
      %v1781 = vsel %vm1764, %v1739, %v726
      %v1782 = vsel %vm1764, %v1740, %v728
      %v1783 = vsel %vm1764, %v1741, %v730
      %v1784 = vsel %vm1764, %v1742, %v732
      %v1785 = vsel %vm1764, %v1743, %v734
      %v1786 = vsel %vm1764, %v1744, %v736
      %v1787 = vsel %vm1764, %v1745, %v738
      %v1788 = vsel %vm1764, %v1746, %v740
      %v1789 = vsel %vm1764, %v1747, %v742
      %v1790 = vsel %vm1764, %v1748, %v744
      %v1791 = vsel %vm1764, %v1749, %v746
      %v1792 = vsel %vm1764, %v1750, %v748
      %v1793 = vsel %vm1764, %v1751, %v750
      %v1794 = vsel %vm1764, %v1752, %v752
      %v1795 = vsel %vm1764, %v1753, %v754
      %v1796 = vsel %vm1764, %v1754, %v756
      %v1797 = vsel %vm1764, %v1755, %v758
      %v1798 = vsel %vm1764, %v1756, %v760
      %v1799 = vsel %vm1764, %v1757, %v762
      %v1800 = vsel %vm1764, %v1758, %v764
      %v1801 = vsel %vm1764, %v1759, %v766
      %v1802 = vsel %vm1764, %v1760, %v768
      %v1803 = vsel %vm1764, %v1761, %v770
      %v1804 = vsel %vm1764, %v1762, %v772
      %v1805 = vsel %vm1764, %v1763, %v774
      %vm1806 = vcmask 97280
      %v1807 = vsel %vm1806, %v1765, %v819
      %v1808 = vsel %vm1806, %v1766, %v821
      %v1809 = vsel %vm1806, %v1767, %v823
      %v1810 = vsel %vm1806, %v1768, %v825
      %v1811 = vsel %vm1806, %v1769, %v827
      %v1812 = vsel %vm1806, %v1770, %v829
      %v1813 = vsel %vm1806, %v1771, %v831
      %v1814 = vsel %vm1806, %v1772, %v833
      %v1815 = vsel %vm1806, %v1773, %v835
      %v1816 = vsel %vm1806, %v1774, %v837
      %v1817 = vsel %vm1806, %v1775, %v839
      %v1818 = vsel %vm1806, %v1776, %v841
      %v1819 = vsel %vm1806, %v1777, %v843
      %v1820 = vsel %vm1806, %v1778, %v845
      %v1821 = vsel %vm1806, %v1779, %v847
      %v1822 = vsel %vm1806, %v1780, %v849
      %v1823 = vsel %vm1806, %v1781, %v851
      %v1824 = vsel %vm1806, %v1782, %v853
      %v1825 = vsel %vm1806, %v1783, %v855
      %v1826 = vsel %vm1806, %v1784, %v857
      %v1827 = vsel %vm1806, %v1785, %v859
      %v1828 = vsel %vm1806, %v1786, %v861
      %v1829 = vsel %vm1806, %v1787, %v863
      %v1830 = vsel %vm1806, %v1788, %v865
      %v1831 = vsel %vm1806, %v1789, %v867
      %v1832 = vsel %vm1806, %v1790, %v869
      %v1833 = vsel %vm1806, %v1791, %v871
      %v1834 = vsel %vm1806, %v1792, %v873
      %v1835 = vsel %vm1806, %v1793, %v875
      %v1836 = vsel %vm1806, %v1794, %v877
      %v1837 = vsel %vm1806, %v1795, %v879
      %v1838 = vsel %vm1806, %v1796, %v881
      %v1839 = vsel %vm1806, %v1797, %v883
      %v1840 = vsel %vm1806, %v1798, %v885
      %v1841 = vsel %vm1806, %v1799, %v887
      %v1842 = vsel %vm1806, %v1800, %v889
      %v1843 = vsel %vm1806, %v1801, %v891
      %v1844 = vsel %vm1806, %v1802, %v893
      %v1845 = vsel %vm1806, %v1803, %v895
      %v1846 = vsel %vm1806, %v1804, %v897
      %v1847 = vsel %vm1806, %v1805, %v899
      %vm1848 = vcmask 130048
      %v1849 = vsel %vm1848, %v1807, %v983
      %v1850 = vsel %vm1848, %v1808, %v985
      %v1851 = vsel %vm1848, %v1809, %v987
      %v1852 = vsel %vm1848, %v1810, %v989
      %v1853 = vsel %vm1848, %v1811, %v991
      %v1854 = vsel %vm1848, %v1812, %v993
      %v1855 = vsel %vm1848, %v1813, %v995
      %v1856 = vsel %vm1848, %v1814, %v997
      %v1857 = vsel %vm1848, %v1815, %v999
      %v1858 = vsel %vm1848, %v1816, %v1001
      %v1859 = vsel %vm1848, %v1817, %v1003
      %v1860 = vsel %vm1848, %v1818, %v1005
      %v1861 = vsel %vm1848, %v1819, %v1007
      %v1862 = vsel %vm1848, %v1820, %v1009
      %v1863 = vsel %vm1848, %v1821, %v1011
      %v1864 = vsel %vm1848, %v1822, %v1013
      %v1865 = vsel %vm1848, %v1823, %v1015
      %v1866 = vsel %vm1848, %v1824, %v1017
      %v1867 = vsel %vm1848, %v1825, %v1019
      %v1868 = vsel %vm1848, %v1826, %v1021
      %v1869 = vsel %vm1848, %v1827, %v1023
      %v1870 = vsel %vm1848, %v1828, %v1025
      %v1871 = vsel %vm1848, %v1829, %v1027
      %v1872 = vsel %vm1848, %v1830, %v1029
      %v1873 = vsel %vm1848, %v1831, %v1031
      %v1874 = vsel %vm1848, %v1832, %v1033
      %v1875 = vsel %vm1848, %v1833, %v1035
      %v1876 = vsel %vm1848, %v1834, %v1037
      %v1877 = vsel %vm1848, %v1835, %v1039
      %v1878 = vsel %vm1848, %v1836, %v1041
      %v1879 = vsel %vm1848, %v1837, %v1043
      %v1880 = vsel %vm1848, %v1838, %v1045
      %v1881 = vsel %vm1848, %v1839, %v1047
      %v1882 = vsel %vm1848, %v1840, %v1049
      %v1883 = vsel %vm1848, %v1841, %v1051
      %v1884 = vsel %vm1848, %v1842, %v1053
      %v1885 = vsel %vm1848, %v1843, %v1055
      %v1886 = vsel %vm1848, %v1844, %v1057
      %v1887 = vsel %vm1848, %v1845, %v1059
      %v1888 = vsel %vm1848, %v1846, %v1061
      %v1889 = vsel %vm1848, %v1847, %v1063
      %vm1890 = vcmask 162816
      %v1891 = vsel %vm1890, %v1849, %v1147
      %v1892 = vsel %vm1890, %v1850, %v1149
      %v1893 = vsel %vm1890, %v1851, %v1151
      %v1894 = vsel %vm1890, %v1852, %v1153
      %v1895 = vsel %vm1890, %v1853, %v1155
      %v1896 = vsel %vm1890, %v1854, %v1157
      %v1897 = vsel %vm1890, %v1855, %v1159
      %v1898 = vsel %vm1890, %v1856, %v1161
      %v1899 = vsel %vm1890, %v1857, %v1163
      %v1900 = vsel %vm1890, %v1858, %v1165
      %v1901 = vsel %vm1890, %v1859, %v1167
      %v1902 = vsel %vm1890, %v1860, %v1169
      %v1903 = vsel %vm1890, %v1861, %v1171
      %v1904 = vsel %vm1890, %v1862, %v1173
      %v1905 = vsel %vm1890, %v1863, %v1175
      %v1906 = vsel %vm1890, %v1864, %v1177
      %v1907 = vsel %vm1890, %v1865, %v1179
      %v1908 = vsel %vm1890, %v1866, %v1181
      %v1909 = vsel %vm1890, %v1867, %v1183
      %v1910 = vsel %vm1890, %v1868, %v1185
      %v1911 = vsel %vm1890, %v1869, %v1187
      %v1912 = vsel %vm1890, %v1870, %v1189
      %v1913 = vsel %vm1890, %v1871, %v1191
      %v1914 = vsel %vm1890, %v1872, %v1193
      %v1915 = vsel %vm1890, %v1873, %v1195
      %v1916 = vsel %vm1890, %v1874, %v1197
      %v1917 = vsel %vm1890, %v1875, %v1199
      %v1918 = vsel %vm1890, %v1876, %v1201
      %v1919 = vsel %vm1890, %v1877, %v1203
      %v1920 = vsel %vm1890, %v1878, %v1205
      %v1921 = vsel %vm1890, %v1879, %v1207
      %v1922 = vsel %vm1890, %v1880, %v1209
      %v1923 = vsel %vm1890, %v1881, %v1211
      %v1924 = vsel %vm1890, %v1882, %v1213
      %v1925 = vsel %vm1890, %v1883, %v1215
      %v1926 = vsel %vm1890, %v1884, %v1217
      %v1927 = vsel %vm1890, %v1885, %v1219
      %v1928 = vsel %vm1890, %v1886, %v1221
      %v1929 = vsel %vm1890, %v1887, %v1223
      %v1930 = vsel %vm1890, %v1888, %v1225
      %v1931 = vsel %vm1890, %v1889, %v1227
      %vm1932 = vcmask 195584
      %v1933 = vsel %vm1932, %v1891, %v1272
      %v1934 = vsel %vm1932, %v1892, %v1274
      %v1935 = vsel %vm1932, %v1893, %v1276
      %v1936 = vsel %vm1932, %v1894, %v1278
      %v1937 = vsel %vm1932, %v1895, %v1280
      %v1938 = vsel %vm1932, %v1896, %v1282
      %v1939 = vsel %vm1932, %v1897, %v1284
      %v1940 = vsel %vm1932, %v1898, %v1286
      %v1941 = vsel %vm1932, %v1899, %v1288
      %v1942 = vsel %vm1932, %v1900, %v1290
      %v1943 = vsel %vm1932, %v1901, %v1292
      %v1944 = vsel %vm1932, %v1902, %v1294
      %v1945 = vsel %vm1932, %v1903, %v1296
      %v1946 = vsel %vm1932, %v1904, %v1298
      %v1947 = vsel %vm1932, %v1905, %v1300
      %v1948 = vsel %vm1932, %v1906, %v1302
      %v1949 = vsel %vm1932, %v1907, %v1304
      %v1950 = vsel %vm1932, %v1908, %v1306
      %v1951 = vsel %vm1932, %v1909, %v1308
      %v1952 = vsel %vm1932, %v1910, %v1310
      %v1953 = vsel %vm1932, %v1911, %v1312
      %v1954 = vsel %vm1932, %v1912, %v1314
      %v1955 = vsel %vm1932, %v1913, %v1316
      %v1956 = vsel %vm1932, %v1914, %v1318
      %v1957 = vsel %vm1932, %v1915, %v1320
      %v1958 = vsel %vm1932, %v1916, %v1322
      %v1959 = vsel %vm1932, %v1917, %v1324
      %v1960 = vsel %vm1932, %v1918, %v1326
      %v1961 = vsel %vm1932, %v1919, %v1328
      %v1962 = vsel %vm1932, %v1920, %v1330
      %v1963 = vsel %vm1932, %v1921, %v1332
      %v1964 = vsel %vm1932, %v1922, %v1334
      %v1965 = vsel %vm1932, %v1923, %v1336
      %v1966 = vsel %vm1932, %v1924, %v1338
      %v1967 = vsel %vm1932, %v1925, %v1340
      %v1968 = vsel %vm1932, %v1926, %v1342
      %v1969 = vsel %vm1932, %v1927, %v1344
      %v1970 = vsel %vm1932, %v1928, %v1346
      %v1971 = vsel %vm1932, %v1929, %v1348
      %v1972 = vsel %vm1932, %v1930, %v1350
      %v1973 = vsel %vm1932, %v1931, %v1352
      %vm1974 = vcmask 228352
      %v1975 = vsel %vm1974, %v1933, %v1436
      %v1976 = vsel %vm1974, %v1934, %v1438
      %v1977 = vsel %vm1974, %v1935, %v1440
      %v1978 = vsel %vm1974, %v1936, %v1442
      %v1979 = vsel %vm1974, %v1937, %v1444
      %v1980 = vsel %vm1974, %v1938, %v1446
      %v1981 = vsel %vm1974, %v1939, %v1448
      %v1982 = vsel %vm1974, %v1940, %v1450
      %v1983 = vsel %vm1974, %v1941, %v1452
      %v1984 = vsel %vm1974, %v1942, %v1454
      %v1985 = vsel %vm1974, %v1943, %v1456
      %v1986 = vsel %vm1974, %v1944, %v1458
      %v1987 = vsel %vm1974, %v1945, %v1460
      %v1988 = vsel %vm1974, %v1946, %v1462
      %v1989 = vsel %vm1974, %v1947, %v1464
      %v1990 = vsel %vm1974, %v1948, %v1466
      %v1991 = vsel %vm1974, %v1949, %v1468
      %v1992 = vsel %vm1974, %v1950, %v1470
      %v1993 = vsel %vm1974, %v1951, %v1472
      %v1994 = vsel %vm1974, %v1952, %v1474
      %v1995 = vsel %vm1974, %v1953, %v1476
      %v1996 = vsel %vm1974, %v1954, %v1478
      %v1997 = vsel %vm1974, %v1955, %v1480
      %v1998 = vsel %vm1974, %v1956, %v1482
      %v1999 = vsel %vm1974, %v1957, %v1484
      %v2000 = vsel %vm1974, %v1958, %v1486
      %v2001 = vsel %vm1974, %v1959, %v1488
      %v2002 = vsel %vm1974, %v1960, %v1490
      %v2003 = vsel %vm1974, %v1961, %v1492
      %v2004 = vsel %vm1974, %v1962, %v1494
      %v2005 = vsel %vm1974, %v1963, %v1496
      %v2006 = vsel %vm1974, %v1964, %v1498
      %v2007 = vsel %vm1974, %v1965, %v1500
      %v2008 = vsel %vm1974, %v1966, %v1502
      %v2009 = vsel %vm1974, %v1967, %v1504
      %v2010 = vsel %vm1974, %v1968, %v1506
      %v2011 = vsel %vm1974, %v1969, %v1508
      %v2012 = vsel %vm1974, %v1970, %v1510
      %v2013 = vsel %vm1974, %v1971, %v1512
      %v2014 = vsel %vm1974, %v1972, %v1514
      %v2015 = vsel %vm1974, %v1973, %v1516
      %vm2016 = vcmask 261120
      %v2017 = vsel %vm2016, %v1975, %v1600
      %v2018 = vsel %vm2016, %v1976, %v1602
      %v2019 = vsel %vm2016, %v1977, %v1604
      %v2020 = vsel %vm2016, %v1978, %v1606
      %v2021 = vsel %vm2016, %v1979, %v1608
      %v2022 = vsel %vm2016, %v1980, %v1610
      %v2023 = vsel %vm2016, %v1981, %v1612
      %v2024 = vsel %vm2016, %v1982, %v1614
      %v2025 = vsel %vm2016, %v1983, %v1616
      %v2026 = vsel %vm2016, %v1984, %v1618
      %v2027 = vsel %vm2016, %v1985, %v1620
      %v2028 = vsel %vm2016, %v1986, %v1622
      %v2029 = vsel %vm2016, %v1987, %v1624
      %v2030 = vsel %vm2016, %v1988, %v1626
      %v2031 = vsel %vm2016, %v1989, %v1628
      %v2032 = vsel %vm2016, %v1990, %v1630
      %v2033 = vsel %vm2016, %v1991, %v1632
      %v2034 = vsel %vm2016, %v1992, %v1634
      %v2035 = vsel %vm2016, %v1993, %v1636
      %v2036 = vsel %vm2016, %v1994, %v1638
      %v2037 = vsel %vm2016, %v1995, %v1640
      %v2038 = vsel %vm2016, %v1996, %v1642
      %v2039 = vsel %vm2016, %v1997, %v1644
      %v2040 = vsel %vm2016, %v1998, %v1646
      %v2041 = vsel %vm2016, %v1999, %v1648
      %v2042 = vsel %vm2016, %v2000, %v1650
      %v2043 = vsel %vm2016, %v2001, %v1652
      %v2044 = vsel %vm2016, %v2002, %v1654
      %v2045 = vsel %vm2016, %v2003, %v1656
      %v2046 = vsel %vm2016, %v2004, %v1658
      %v2047 = vsel %vm2016, %v2005, %v1660
      %v2048 = vsel %vm2016, %v2006, %v1662
      %v2049 = vsel %vm2016, %v2007, %v1664
      %v2050 = vsel %vm2016, %v2008, %v1666
      %v2051 = vsel %vm2016, %v2009, %v1668
      %v2052 = vsel %vm2016, %v2010, %v1670
      %v2053 = vsel %vm2016, %v2011, %v1672
      %v2054 = vsel %vm2016, %v2012, %v1674
      %v2055 = vsel %vm2016, %v2013, %v1676
      %v2056 = vsel %vm2016, %v2014, %v1678
      %v2057 = vsel %vm2016, %v2015, %v1680
      %vm2058 = vcmask 293888
      %v2059 = vsel %vm2058, %v2017, 0.0
      %v2060 = vsel %vm2058, %v2018, 0.0
      %v2061 = vsel %vm2058, %v2019, 0.0
      %v2062 = vsel %vm2058, %v2020, 0.0
      %v2063 = vsel %vm2058, %v2021, 0.0
      %v2064 = vsel %vm2058, %v2022, 0.0
      %v2065 = vsel %vm2058, %v2023, 0.0
      %v2066 = vsel %vm2058, %v2024, 0.0
      %v2067 = vsel %vm2058, %v2025, 0.0
      %v2068 = vsel %vm2058, %v2026, 0.0
      %v2069 = vsel %vm2058, %v2027, 0.0
      %v2070 = vsel %vm2058, %v2028, 0.0
      %v2071 = vsel %vm2058, %v2029, 0.0
      %v2072 = vsel %vm2058, %v2030, 0.0
      %v2073 = vsel %vm2058, %v2031, 0.0
      %v2074 = vsel %vm2058, %v2032, 0.0
      %v2075 = vsel %vm2058, %v2033, 0.0
      %v2076 = vsel %vm2058, %v2034, 0.0
      %v2077 = vsel %vm2058, %v2035, 0.0
      %v2078 = vsel %vm2058, %v2036, 0.0
      %v2079 = vsel %vm2058, %v2037, 0.0
      %v2080 = vsel %vm2058, %v2038, 0.0
      %v2081 = vsel %vm2058, %v2039, 0.0
      %v2082 = vsel %vm2058, %v2040, 0.0
      %v2083 = vsel %vm2058, %v2041, 0.0
      %v2084 = vsel %vm2058, %v2042, 0.0
      %v2085 = vsel %vm2058, %v2043, 0.0
      %v2086 = vsel %vm2058, %v2044, 0.0
      %v2087 = vsel %vm2058, %v2045, 0.0
      %v2088 = vsel %vm2058, %v2046, 0.0
      %v2089 = vsel %vm2058, %v2047, 0.0
      %v2090 = vsel %vm2058, %v2048, 0.0
      %v2091 = vsel %vm2058, %v2049, 0.0
      %v2092 = vsel %vm2058, %v2050, 0.0
      %v2093 = vsel %vm2058, %v2051, 0.0
      %v2094 = vsel %vm2058, %v2052, 0.0
      %v2095 = vsel %vm2058, %v2053, 0.0
      %v2096 = vsel %vm2058, %v2054, 0.0
      %v2097 = vsel %vm2058, %v2055, 0.0
      %v2098 = vsel %vm2058, %v2056, 0.0
      %v2099 = vsel %vm2058, %v2057, 0.0
      %v2100 = vpack.c.bf16 %v2060, %v2059
      %v2101 = vpack.c.bf16 %v2062, %v2061
      %v2102 = vpack.c.bf16 %v2064, %v2063
      %v2103 = vpack.c.bf16 %v2066, %v2065
      %v2104 = vpack.c.bf16 %v2068, %v2067
      %v2105 = vpack.c.bf16 %v2070, %v2069
      %v2106 = vpack.c.bf16 %v2072, %v2071
      %v2107 = vpack.c.bf16 %v2074, %v2073
      %v2108 = vpack.c.bf16 %v2076, %v2075
      %v2109 = vpack.c.bf16 %v2078, %v2077
      %v2110 = vpack.c.bf16 %v2080, %v2079
      %v2111 = vpack.c.bf16 %v2082, %v2081
      %v2112 = vpack.c.bf16 %v2084, %v2083
      %v2113 = vpack.c.bf16 %v2086, %v2085
      %v2114 = vpack.c.bf16 %v2088, %v2087
      %v2115 = vpack.c.bf16 %v2090, %v2089
      %v2116 = vpack.c.bf16 %v2092, %v2091
      %v2117 = vpack.c.bf16 %v2094, %v2093
      %v2118 = vpack.c.bf16 %v2096, %v2095
      %v2119 = vpack.c.bf16 %v2098, %v2097
      %v2120 = vpack.c.bf16 %v2099, %v2099
      %v2121 = vld [vmem:[%s2] sm:$0xf]
      %v2122 = vld [vmem:[%s2 + $0x4] sm:$0xf]
      %v2123 = vld [vmem:[%s2 + $0x8] sm:$0xf]
      %v2124 = vld [vmem:[%s2 + $0xc] sm:$0xf]
      %v2125 = vld [vmem:[%s2 + $0x10] sm:$0xf]
      %v2126 = vld [vmem:[%s2 + $0x14] sm:$0xf]
      %v2127 = vld [vmem:[%s2 + $0x18] sm:$0xf]
      %v2128 = vld [vmem:[%s2 + $0x1c] sm:$0xf]
      %v2129 = vld [vmem:[%s2 + $0x20] sm:$0xf]
      %v2130 = vld [vmem:[%s2 + $0x24] sm:$0xf]
      %v2131 = vld [vmem:[%s2 + $0x28] sm:$0xf]
      %v2132 = vld [vmem:[%s2 + $0x2c] sm:$0xf]
      %v2133 = vld [vmem:[%s2 + $0x30] sm:$0xf]
      %v2134 = vld [vmem:[%s2 + $0x34] sm:$0xf]
      %v2135 = vld [vmem:[%s2 + $0x38] sm:$0xf]
      %v2136 = vld [vmem:[%s2 + $0x3c] sm:$0xf]
      %v2137 = vld [vmem:[%s3] sm:$0x1]
      %v2139 = vlaneseq
      %v2140 = vshrl.u32 %v2139, 7
      %v2141 = vsub.s32 0, %v2140
      %v2142 = vrot.slane %v2137, %v2141
      %v2160 = vunpack.c.l.b16 %v2121
      %v2161 = vunpack.c.l.b16 %v2122
      %v2162 = vunpack.c.l.b16 %v2123
      %v2163 = vunpack.c.l.b16 %v2124
      %v2164 = vunpack.c.l.b16 %v2125
      %v2165 = vunpack.c.l.b16 %v2126
      %v2166 = vunpack.c.l.b16 %v2127
      %v2167 = vunpack.c.l.b16 %v2128
      %v2168 = vunpack.c.l.b16 %v2129
      %v2169 = vunpack.c.l.b16 %v2130
      %v2170 = vunpack.c.l.b16 %v2131
      %v2171 = vunpack.c.l.b16 %v2132
      %v2172 = vunpack.c.l.b16 %v2133
      %v2173 = vunpack.c.l.b16 %v2134
      %v2174 = vunpack.c.l.b16 %v2135
      %v2175 = vunpack.c.l.b16 %v2136
      %v2176 = vpack.c.b16 %v2161, %v2160
      %v2177 = vpack.c.b16 %v2163, %v2162
      %v2178 = vpack.c.b16 %v2165, %v2164
      %v2179 = vpack.c.b16 %v2167, %v2166
      %v2180 = vpack.c.b16 %v2169, %v2168
      %v2181 = vpack.c.b16 %v2171, %v2170
      %v2182 = vpack.c.b16 %v2173, %v2172
      %v2183 = vpack.c.b16 %v2175, %v2174
      %2192 = vmatprep.subr.bf16.mxu0 0
      %2193 = vmatpush1.bf16.msra.mxu0 %v2176
      %2194 = vmatprep.subr.bf16.mxu0 0
      %2195 = vmatpush1.bf16.msra.mxu0 %v2177
      %2196 = vmatprep.subr.bf16.mxu0 0
      %2197 = vmatpush1.bf16.msra.mxu0 %v2178
      %2198 = vmatprep.subr.bf16.mxu0 0
      %2199 = vmatpush1.bf16.msra.mxu0 %v2179
      %2200 = vmatprep.subr.bf16.mxu0 0
      %2201 = vmatpush1.bf16.msra.mxu0 %v2180
      %2202 = vmatprep.subr.bf16.mxu0 0
      %2203 = vmatpush1.bf16.msra.mxu0 %v2181
      %2204 = vmatprep.subr.bf16.mxu0 0
      %2205 = vmatpush1.bf16.msra.mxu0 %v2182
      %2206 = vmatprep.subr.bf16.mxu0 0
      %2207 = vmatpush1.bf16.msra.mxu0 %v2183
      %2208 = vmatprep.subr.bf16.mxu0 0
      %2209 = vmatpush1.bf16.msra.mxu0 0
      %2210 = vmatprep.subr.bf16.mxu0 0
      %2211 = vmatpush1.bf16.msra.mxu0 0
      %2212 = vmatprep.subr.bf16.mxu0 0
      %2213 = vmatpush1.bf16.msra.mxu0 0
      %2214 = vmatprep.subr.bf16.mxu0 0
      %2215 = vmatpush1.bf16.msra.mxu0 0
      %2216 = vmatprep.subr.bf16.mxu0 0
      %2217 = vmatpush1.bf16.msra.mxu0 0
      %2218 = vmatprep.subr.bf16.mxu0 0
      %2219 = vmatpush1.bf16.msra.mxu0 0
      %2220 = vmatprep.subr.bf16.mxu0 0
      %2221 = vmatpush1.bf16.msra.mxu0 0
      %2222 = vmatprep.subr.bf16.mxu0 0
      %2223 = vmatpush1.bf16.msra.mxu0 0
      %2224 = vmatprep.mubr.bf16.mxu0 0
      %2225 = vmatmul.mubr.bf16.gmra.mrb[0].mxu0 %v2100
      %v2226 = vpop.f32.mrb[0].mxu0
      %v2227 = vadd.f32 %v2142, %v2226
      %v2228 = vpop.f32.mrb[0].mxu0
      %v2229 = vpop.f32.mrb[0].mxu0
      %v2230 = vadd.f32 %v2142, %v2229
      %v2231 = vpop.f32.mrb[0].mxu0
      %2232 = vmatprep.mubr.bf16.mxu0 0
      %2233 = vmatmul.mubr.bf16.gmra.mrb[0].mxu0 %v2101
      %v2234 = vpop.f32.mrb[0].mxu0
      %v2235 = vadd.f32 %v2142, %v2234
      %v2236 = vpop.f32.mrb[0].mxu0
      %v2237 = vpop.f32.mrb[0].mxu0
      %v2238 = vadd.f32 %v2142, %v2237
      %v2239 = vpop.f32.mrb[0].mxu0
      %2240 = vmatprep.mubr.bf16.mxu0 0
      %2241 = vmatmul.mubr.bf16.gmra.mrb[0].mxu0 %v2102
      %v2242 = vpop.f32.mrb[0].mxu0
      %v2243 = vadd.f32 %v2142, %v2242
      %v2244 = vpop.f32.mrb[0].mxu0
      %v2245 = vpop.f32.mrb[0].mxu0
      %v2246 = vadd.f32 %v2142, %v2245
      %v2247 = vpop.f32.mrb[0].mxu0
      %2248 = vmatprep.mubr.bf16.mxu0 0
      %2249 = vmatmul.mubr.bf16.gmra.mrb[0].mxu0 %v2103
      %v2250 = vpop.f32.mrb[0].mxu0
      %v2251 = vadd.f32 %v2142, %v2250
      %v2252 = vpop.f32.mrb[0].mxu0
      %v2253 = vpop.f32.mrb[0].mxu0
      %v2254 = vadd.f32 %v2142, %v2253
      %v2255 = vpop.f32.mrb[0].mxu0
      %2256 = vmatprep.mubr.bf16.mxu0 0
      %2257 = vmatmul.mubr.bf16.gmra.mrb[0].mxu0 %v2104
      %v2258 = vpop.f32.mrb[0].mxu0
      %v2259 = vadd.f32 %v2142, %v2258
      %v2260 = vpop.f32.mrb[0].mxu0
      %v2261 = vpop.f32.mrb[0].mxu0
      %v2262 = vadd.f32 %v2142, %v2261
      %v2263 = vpop.f32.mrb[0].mxu0
      %2264 = vmatprep.mubr.bf16.mxu0 0
      %2265 = vmatmul.mubr.bf16.gmra.mrb[0].mxu0 %v2105
      %v2266 = vpop.f32.mrb[0].mxu0
      %v2267 = vadd.f32 %v2142, %v2266
      %v2268 = vpop.f32.mrb[0].mxu0
      %v2269 = vpop.f32.mrb[0].mxu0
      %v2270 = vadd.f32 %v2142, %v2269
      %v2271 = vpop.f32.mrb[0].mxu0
      %2272 = vmatprep.mubr.bf16.mxu0 0
      %2273 = vmatmul.mubr.bf16.gmra.mrb[0].mxu0 %v2106
      %v2274 = vpop.f32.mrb[0].mxu0
      %v2275 = vadd.f32 %v2142, %v2274
      %v2276 = vpop.f32.mrb[0].mxu0
      %v2277 = vpop.f32.mrb[0].mxu0
      %v2278 = vadd.f32 %v2142, %v2277
      %v2279 = vpop.f32.mrb[0].mxu0
      %2280 = vmatprep.mubr.bf16.mxu0 0
      %2281 = vmatmul.mubr.bf16.gmra.mrb[0].mxu0 %v2107
      %v2282 = vpop.f32.mrb[0].mxu0
      %v2283 = vadd.f32 %v2142, %v2282
      %v2284 = vpop.f32.mrb[0].mxu0
      %v2285 = vpop.f32.mrb[0].mxu0
      %v2286 = vadd.f32 %v2142, %v2285
      %v2287 = vpop.f32.mrb[0].mxu0
      %2288 = vmatprep.mubr.bf16.mxu0 0
      %2289 = vmatmul.mubr.bf16.gmra.mrb[0].mxu0 %v2108
      %v2290 = vpop.f32.mrb[0].mxu0
      %v2291 = vadd.f32 %v2142, %v2290
      %v2292 = vpop.f32.mrb[0].mxu0
      %v2293 = vpop.f32.mrb[0].mxu0
      %v2294 = vadd.f32 %v2142, %v2293
      %v2295 = vpop.f32.mrb[0].mxu0
      %2296 = vmatprep.mubr.bf16.mxu0 0
      %2297 = vmatmul.mubr.bf16.gmra.mrb[0].mxu0 %v2109
      %v2298 = vpop.f32.mrb[0].mxu0
      %v2299 = vadd.f32 %v2142, %v2298
      %v2300 = vpop.f32.mrb[0].mxu0
      %v2301 = vpop.f32.mrb[0].mxu0
      %v2302 = vadd.f32 %v2142, %v2301
      %v2303 = vpop.f32.mrb[0].mxu0
      %2304 = vmatprep.mubr.bf16.mxu0 0
      %2305 = vmatmul.mubr.bf16.gmra.mrb[0].mxu0 %v2110
      %v2306 = vpop.f32.mrb[0].mxu0
      %v2307 = vadd.f32 %v2142, %v2306
      %v2308 = vpop.f32.mrb[0].mxu0
      %v2309 = vpop.f32.mrb[0].mxu0
      %v2310 = vadd.f32 %v2142, %v2309
      %v2311 = vpop.f32.mrb[0].mxu0
      %2312 = vmatprep.mubr.bf16.mxu0 0
      %2313 = vmatmul.mubr.bf16.gmra.mrb[0].mxu0 %v2111
      %v2314 = vpop.f32.mrb[0].mxu0
      %v2315 = vadd.f32 %v2142, %v2314
      %v2316 = vpop.f32.mrb[0].mxu0
      %v2317 = vpop.f32.mrb[0].mxu0
      %v2318 = vadd.f32 %v2142, %v2317
      %v2319 = vpop.f32.mrb[0].mxu0
      %2320 = vmatprep.mubr.bf16.mxu0 0
      %2321 = vmatmul.mubr.bf16.gmra.mrb[0].mxu0 %v2112
      %v2322 = vpop.f32.mrb[0].mxu0
      %v2323 = vadd.f32 %v2142, %v2322
      %v2324 = vpop.f32.mrb[0].mxu0
      %v2325 = vpop.f32.mrb[0].mxu0
      %v2326 = vadd.f32 %v2142, %v2325
      %v2327 = vpop.f32.mrb[0].mxu0
      %2328 = vmatprep.mubr.bf16.mxu0 0
      %2329 = vmatmul.mubr.bf16.gmra.mrb[0].mxu0 %v2113
      %v2330 = vpop.f32.mrb[0].mxu0
      %v2331 = vadd.f32 %v2142, %v2330
      %v2332 = vpop.f32.mrb[0].mxu0
      %v2333 = vpop.f32.mrb[0].mxu0
      %v2334 = vadd.f32 %v2142, %v2333
      %v2335 = vpop.f32.mrb[0].mxu0
      %2336 = vmatprep.mubr.bf16.mxu0 0
      %2337 = vmatmul.mubr.bf16.gmra.mrb[0].mxu0 %v2114
      %v2338 = vpop.f32.mrb[0].mxu0
      %v2339 = vadd.f32 %v2142, %v2338
      %v2340 = vpop.f32.mrb[0].mxu0
      %v2341 = vpop.f32.mrb[0].mxu0
      %v2342 = vadd.f32 %v2142, %v2341
      %v2343 = vpop.f32.mrb[0].mxu0
      %2344 = vmatprep.mubr.bf16.mxu0 0
      %2345 = vmatmul.mubr.bf16.gmra.mrb[0].mxu0 %v2115
      %v2346 = vpop.f32.mrb[0].mxu0
      %v2347 = vadd.f32 %v2142, %v2346
      %v2348 = vpop.f32.mrb[0].mxu0
      %v2349 = vpop.f32.mrb[0].mxu0
      %v2350 = vadd.f32 %v2142, %v2349
      %v2351 = vpop.f32.mrb[0].mxu0
      %2352 = vmatprep.mubr.bf16.mxu0 0
      %2353 = vmatmul.mubr.bf16.gmra.mrb[0].mxu0 %v2116
      %v2354 = vpop.f32.mrb[0].mxu0
      %v2355 = vadd.f32 %v2142, %v2354
      %v2356 = vpop.f32.mrb[0].mxu0
      %v2357 = vpop.f32.mrb[0].mxu0
      %v2358 = vadd.f32 %v2142, %v2357
      %v2359 = vpop.f32.mrb[0].mxu0
      %2360 = vmatprep.mubr.bf16.mxu0 0
      %2361 = vmatmul.mubr.bf16.gmra.mrb[0].mxu0 %v2117
      %v2362 = vpop.f32.mrb[0].mxu0
      %v2363 = vadd.f32 %v2142, %v2362
      %v2364 = vpop.f32.mrb[0].mxu0
      %v2365 = vpop.f32.mrb[0].mxu0
      %v2366 = vadd.f32 %v2142, %v2365
      %v2367 = vpop.f32.mrb[0].mxu0
      %2368 = vmatprep.mubr.bf16.mxu0 0
      %2369 = vmatmul.mubr.bf16.gmra.mrb[0].mxu0 %v2118
      %v2370 = vpop.f32.mrb[0].mxu0
      %v2371 = vadd.f32 %v2142, %v2370
      %v2372 = vpop.f32.mrb[0].mxu0
      %v2373 = vpop.f32.mrb[0].mxu0
      %v2374 = vadd.f32 %v2142, %v2373
      %v2375 = vpop.f32.mrb[0].mxu0
      %2376 = vmatprep.mubr.bf16.mxu0 0
      %2377 = vmatmul.mubr.bf16.gmra.mrb[0].mxu0 %v2119
      %v2378 = vpop.f32.mrb[0].mxu0
      %v2379 = vadd.f32 %v2142, %v2378
      %v2380 = vpop.f32.mrb[0].mxu0
      %v2381 = vpop.f32.mrb[0].mxu0
      %v2382 = vadd.f32 %v2142, %v2381
      %v2383 = vpop.f32.mrb[0].mxu0
      %2384 = vmatprep.mubr.bf16.mxu0 0
      %2385 = vmatmul.mubr.bf16.gmra.mrb[0].mxu0 %v2120
      %v2386 = vpop.f32.mrb[0].mxu0
      %v2387 = vadd.f32 %v2142, %v2386
      %v2388 = vpop.f32.mrb[0].mxu0
      %v2389 = vpop.f32.mrb[0].mxu0
      %v2390 = vpop.f32.mrb[0].mxu0
      %2391 = vdwg.mxu0
      %v2392 = vmax.f32 %v2227, 0.0
      %v2393 = vmax.f32 %v2230, 0.0
      %v2394 = vmax.f32 %v2235, 0.0
      %v2395 = vmax.f32 %v2238, 0.0
      %v2396 = vmax.f32 %v2243, 0.0
      %v2397 = vmax.f32 %v2246, 0.0
      %v2398 = vmax.f32 %v2251, 0.0
      %v2399 = vmax.f32 %v2254, 0.0
      %v2400 = vmax.f32 %v2259, 0.0
      %v2401 = vmax.f32 %v2262, 0.0
      %v2402 = vmax.f32 %v2267, 0.0
      %v2403 = vmax.f32 %v2270, 0.0
      %v2404 = vmax.f32 %v2275, 0.0
      %v2405 = vmax.f32 %v2278, 0.0
      %v2406 = vmax.f32 %v2283, 0.0
      %v2407 = vmax.f32 %v2286, 0.0
      %v2408 = vmax.f32 %v2291, 0.0
      %v2409 = vmax.f32 %v2294, 0.0
      %v2410 = vmax.f32 %v2299, 0.0
      %v2411 = vmax.f32 %v2302, 0.0
      %v2412 = vmax.f32 %v2307, 0.0
      %v2413 = vmax.f32 %v2310, 0.0
      %v2414 = vmax.f32 %v2315, 0.0
      %v2415 = vmax.f32 %v2318, 0.0
      %v2416 = vmax.f32 %v2323, 0.0
      %v2417 = vmax.f32 %v2326, 0.0
      %v2418 = vmax.f32 %v2331, 0.0
      %v2419 = vmax.f32 %v2334, 0.0
      %v2420 = vmax.f32 %v2339, 0.0
      %v2421 = vmax.f32 %v2342, 0.0
      %v2422 = vmax.f32 %v2347, 0.0
      %v2423 = vmax.f32 %v2350, 0.0
      %v2424 = vmax.f32 %v2355, 0.0
      %v2425 = vmax.f32 %v2358, 0.0
      %v2426 = vmax.f32 %v2363, 0.0
      %v2427 = vmax.f32 %v2366, 0.0
      %v2428 = vmax.f32 %v2371, 0.0
      %v2429 = vmax.f32 %v2374, 0.0
      %v2430 = vmax.f32 %v2379, 0.0
      %v2431 = vmax.f32 %v2382, 0.0
      %v2432 = vmax.f32 %v2387, 0.0
      %v2433 = vld [vmem:[%s1] sm:$0xff]
      %v2434 = vld [vmem:[%s1 + $0x8] sm:$0xff]
      %v2435 = vld [vmem:[%s1 + $0x10] sm:$0xff]
      %v2436 = vld [vmem:[%s1 + $0x18] sm:$0xff]
      %v2437 = vld [vmem:[%s1 + $0x20] sm:$0xff]
      %v2438 = vld [vmem:[%s1 + $0x28] sm:$0xff]
      %v2439 = vld [vmem:[%s1 + $0x30] sm:$0xff]
      %v2440 = vld [vmem:[%s1 + $0x38] sm:$0xff]
      %v2441 = vld [vmem:[%s1 + $0x40] sm:$0xff]
      %v2442 = vld [vmem:[%s1 + $0x48] sm:$0xff]
      %v2443 = vld [vmem:[%s1 + $0x50] sm:$0xff]
      %v2444 = vld [vmem:[%s1 + $0x58] sm:$0xff]
      %v2445 = vld [vmem:[%s1 + $0x60] sm:$0xff]
      %v2446 = vld [vmem:[%s1 + $0x68] sm:$0xff]
      %v2447 = vld [vmem:[%s1 + $0x70] sm:$0xff]
      %v2448 = vld [vmem:[%s1 + $0x78] sm:$0xff]
      %v2449 = vld [vmem:[%s1 + $0x80] sm:$0xff]
      %v2450 = vld [vmem:[%s1 + $0x88] sm:$0xff]
      %v2451 = vld [vmem:[%s1 + $0x90] sm:$0xff]
      %v2452 = vld [vmem:[%s1 + $0x98] sm:$0xff]
      %v2453 = vld [vmem:[%s1 + $0xa0] sm:$0xff]
      %v2454 = vld [vmem:[%s1 + $0xa8] sm:$0xff]
      %v2455 = vld [vmem:[%s1 + $0xb0] sm:$0xff]
      %v2456 = vld [vmem:[%s1 + $0xb8] sm:$0xff]
      %v2457 = vld [vmem:[%s1 + $0xc0] sm:$0xff]
      %v2458 = vld [vmem:[%s1 + $0xc8] sm:$0xff]
      %v2459 = vld [vmem:[%s1 + $0xd0] sm:$0xff]
      %v2460 = vld [vmem:[%s1 + $0xd8] sm:$0xff]
      %v2461 = vld [vmem:[%s1 + $0xe0] sm:$0xff]
      %v2462 = vld [vmem:[%s1 + $0xe8] sm:$0xff]
      %v2463 = vld [vmem:[%s1 + $0xf0] sm:$0xff]
      %v2464 = vld [vmem:[%s1 + $0xf8] sm:$0xff]
      %v2465 = vld [vmem:[%s1 + $0x100] sm:$0xff]
      %v2466 = vld [vmem:[%s1 + $0x108] sm:$0xff]
      %v2467 = vld [vmem:[%s1 + $0x110] sm:$0xff]
      %v2468 = vld [vmem:[%s1 + $0x118] sm:$0xff]
      %v2469 = vld [vmem:[%s1 + $0x120] sm:$0xff]
      %v2470 = vld [vmem:[%s1 + $0x128] sm:$0xff]
      %v2471 = vld [vmem:[%s1 + $0x130] sm:$0xff]
      %v2472 = vld [vmem:[%s1 + $0x138] sm:$0xff]
      %v2473 = vld [vmem:[%s1 + $0x140] sm:$0xff]
      %2475 = vset.pattern.permute.xlu0 0
      %2476 = vperm.xlu0 %2475, %v2433
      %v2477 = vpop.permute.xlu0 %2476
      %2480 = vset.pattern.permute.xlu0 0
      %2481 = vperm.xlu0 %2480, %v2434
      %v2482 = vpop.permute.xlu0 %2481
      %2485 = vset.pattern.permute.xlu0 0
      %2486 = vperm.xlu0 %2485, %v2435
      %v2487 = vpop.permute.xlu0 %2486
      %2490 = vset.pattern.permute.xlu0 0
      %2491 = vperm.xlu0 %2490, %v2436
      %v2492 = vpop.permute.xlu0 %2491
      %2495 = vset.pattern.permute.xlu0 0
      %2496 = vperm.xlu0 %2495, %v2437
      %v2497 = vpop.permute.xlu0 %2496
      %2500 = vset.pattern.permute.xlu0 0
      %2501 = vperm.xlu0 %2500, %v2438
      %v2502 = vpop.permute.xlu0 %2501
      %2505 = vset.pattern.permute.xlu0 0
      %2506 = vperm.xlu0 %2505, %v2439
      %v2507 = vpop.permute.xlu0 %2506
      %2510 = vset.pattern.permute.xlu0 0
      %2511 = vperm.xlu0 %2510, %v2440
      %v2512 = vpop.permute.xlu0 %2511
      %2515 = vset.pattern.permute.xlu0 0
      %2516 = vperm.xlu0 %2515, %v2441
      %v2517 = vpop.permute.xlu0 %2516
      %2520 = vset.pattern.permute.xlu0 0
      %2521 = vperm.xlu0 %2520, %v2442
      %v2522 = vpop.permute.xlu0 %2521
      %2525 = vset.pattern.permute.xlu0 0
      %2526 = vperm.xlu0 %2525, %v2443
      %v2527 = vpop.permute.xlu0 %2526
      %2530 = vset.pattern.permute.xlu0 0
      %2531 = vperm.xlu0 %2530, %v2444
      %v2532 = vpop.permute.xlu0 %2531
      %2535 = vset.pattern.permute.xlu0 0
      %2536 = vperm.xlu0 %2535, %v2445
      %v2537 = vpop.permute.xlu0 %2536
      %2540 = vset.pattern.permute.xlu0 0
      %2541 = vperm.xlu0 %2540, %v2446
      %v2542 = vpop.permute.xlu0 %2541
      %2545 = vset.pattern.permute.xlu0 0
      %2546 = vperm.xlu0 %2545, %v2447
      %v2547 = vpop.permute.xlu0 %2546
      %2550 = vset.pattern.permute.xlu0 0
      %2551 = vperm.xlu0 %2550, %v2448
      %v2552 = vpop.permute.xlu0 %2551
      %2555 = vset.pattern.permute.xlu0 0
      %2556 = vperm.xlu0 %2555, %v2449
      %v2557 = vpop.permute.xlu0 %2556
      %2560 = vset.pattern.permute.xlu0 0
      %2561 = vperm.xlu0 %2560, %v2450
      %v2562 = vpop.permute.xlu0 %2561
      %2565 = vset.pattern.permute.xlu0 0
      %2566 = vperm.xlu0 %2565, %v2451
      %v2567 = vpop.permute.xlu0 %2566
      %2570 = vset.pattern.permute.xlu0 0
      %2571 = vperm.xlu0 %2570, %v2452
      %v2572 = vpop.permute.xlu0 %2571
      %2575 = vset.pattern.permute.xlu0 0
      %2576 = vperm.xlu0 %2575, %v2453
      %v2577 = vpop.permute.xlu0 %2576
      %2580 = vset.pattern.permute.xlu0 0
      %2581 = vperm.xlu0 %2580, %v2454
      %v2582 = vpop.permute.xlu0 %2581
      %2585 = vset.pattern.permute.xlu0 0
      %2586 = vperm.xlu0 %2585, %v2455
      %v2587 = vpop.permute.xlu0 %2586
      %2590 = vset.pattern.permute.xlu0 0
      %2591 = vperm.xlu0 %2590, %v2456
      %v2592 = vpop.permute.xlu0 %2591
      %2595 = vset.pattern.permute.xlu0 0
      %2596 = vperm.xlu0 %2595, %v2457
      %v2597 = vpop.permute.xlu0 %2596
      %2600 = vset.pattern.permute.xlu0 0
      %2601 = vperm.xlu0 %2600, %v2458
      %v2602 = vpop.permute.xlu0 %2601
      %2605 = vset.pattern.permute.xlu0 0
      %2606 = vperm.xlu0 %2605, %v2459
      %v2607 = vpop.permute.xlu0 %2606
      %2610 = vset.pattern.permute.xlu0 0
      %2611 = vperm.xlu0 %2610, %v2460
      %v2612 = vpop.permute.xlu0 %2611
      %2615 = vset.pattern.permute.xlu0 0
      %2616 = vperm.xlu0 %2615, %v2461
      %v2617 = vpop.permute.xlu0 %2616
      %2620 = vset.pattern.permute.xlu0 0
      %2621 = vperm.xlu0 %2620, %v2462
      %v2622 = vpop.permute.xlu0 %2621
      %2625 = vset.pattern.permute.xlu0 0
      %2626 = vperm.xlu0 %2625, %v2463
      %v2627 = vpop.permute.xlu0 %2626
      %2630 = vset.pattern.permute.xlu0 0
      %2631 = vperm.xlu0 %2630, %v2464
      %v2632 = vpop.permute.xlu0 %2631
      %2635 = vset.pattern.permute.xlu0 0
      %2636 = vperm.xlu0 %2635, %v2465
      %v2637 = vpop.permute.xlu0 %2636
      %2640 = vset.pattern.permute.xlu0 0
      %2641 = vperm.xlu0 %2640, %v2466
      %v2642 = vpop.permute.xlu0 %2641
      %2645 = vset.pattern.permute.xlu0 0
      %2646 = vperm.xlu0 %2645, %v2467
      %v2647 = vpop.permute.xlu0 %2646
      %2650 = vset.pattern.permute.xlu0 0
      %2651 = vperm.xlu0 %2650, %v2468
      %v2652 = vpop.permute.xlu0 %2651
      %2655 = vset.pattern.permute.xlu0 0
      %2656 = vperm.xlu0 %2655, %v2469
      %v2657 = vpop.permute.xlu0 %2656
      %2660 = vset.pattern.permute.xlu0 0
      %2661 = vperm.xlu0 %2660, %v2470
      %v2662 = vpop.permute.xlu0 %2661
      %2665 = vset.pattern.permute.xlu0 0
      %2666 = vperm.xlu0 %2665, %v2471
      %v2667 = vpop.permute.xlu0 %2666
      %2670 = vset.pattern.permute.xlu0 0
      %2671 = vperm.xlu0 %2670, %v2472
      %v2672 = vpop.permute.xlu0 %2671
      %2675 = vset.pattern.permute.xlu0 0
      %2676 = vperm.xlu0 %2675, %v2473
      %v2677 = vpop.permute.xlu0 %2676
      %v2679 = vmul.f32 %v2392, %v2477
      %v2680 = vmul.f32 %v2393, %v2482
      %v2681 = vmul.f32 %v2394, %v2487
      %v2682 = vmul.f32 %v2395, %v2492
      %v2683 = vmul.f32 %v2396, %v2497
      %v2684 = vmul.f32 %v2397, %v2502
      %v2685 = vmul.f32 %v2398, %v2507
      %v2686 = vmul.f32 %v2399, %v2512
      %v2687 = vmul.f32 %v2400, %v2517
      %v2688 = vmul.f32 %v2401, %v2522
      %v2689 = vmul.f32 %v2402, %v2527
      %v2690 = vmul.f32 %v2403, %v2532
      %v2691 = vmul.f32 %v2404, %v2537
      %v2692 = vmul.f32 %v2405, %v2542
      %v2693 = vmul.f32 %v2406, %v2547
      %v2694 = vmul.f32 %v2407, %v2552
      %v2695 = vmul.f32 %v2408, %v2557
      %v2696 = vmul.f32 %v2409, %v2562
      %v2697 = vmul.f32 %v2410, %v2567
      %v2698 = vmul.f32 %v2411, %v2572
      %v2699 = vmul.f32 %v2412, %v2577
      %v2700 = vmul.f32 %v2413, %v2582
      %v2701 = vmul.f32 %v2414, %v2587
      %v2702 = vmul.f32 %v2415, %v2592
      %v2703 = vmul.f32 %v2416, %v2597
      %v2704 = vmul.f32 %v2417, %v2602
      %v2705 = vmul.f32 %v2418, %v2607
      %v2706 = vmul.f32 %v2419, %v2612
      %v2707 = vmul.f32 %v2420, %v2617
      %v2708 = vmul.f32 %v2421, %v2622
      %v2709 = vmul.f32 %v2422, %v2627
      %v2710 = vmul.f32 %v2423, %v2632
      %v2711 = vmul.f32 %v2424, %v2637
      %v2712 = vmul.f32 %v2425, %v2642
      %v2713 = vmul.f32 %v2426, %v2647
      %v2714 = vmul.f32 %v2427, %v2652
      %v2715 = vmul.f32 %v2428, %v2657
      %v2716 = vmul.f32 %v2429, %v2662
      %v2717 = vmul.f32 %v2430, %v2667
      %v2718 = vmul.f32 %v2431, %v2672
      %v2719 = vmul.f32 %v2432, %v2677
      %v2720 = vadd.f32 %v2679, %v2680
      %v2721 = vadd.f32 %v2720, %v2681
      %v2722 = vadd.f32 %v2721, %v2682
      %v2723 = vadd.f32 %v2722, %v2683
      %v2724 = vadd.f32 %v2723, %v2684
      %v2725 = vadd.f32 %v2724, %v2685
      %v2726 = vadd.f32 %v2725, %v2686
      %v2727 = vadd.f32 %v2726, %v2687
      %v2728 = vadd.f32 %v2727, %v2688
      %v2729 = vadd.f32 %v2728, %v2689
      %v2730 = vadd.f32 %v2729, %v2690
      %v2731 = vadd.f32 %v2730, %v2691
      %v2732 = vadd.f32 %v2731, %v2692
      %v2733 = vadd.f32 %v2732, %v2693
      %v2734 = vadd.f32 %v2733, %v2694
      %v2735 = vadd.f32 %v2734, %v2695
      %v2736 = vadd.f32 %v2735, %v2696
      %v2737 = vadd.f32 %v2736, %v2697
      %v2738 = vadd.f32 %v2737, %v2698
      %v2739 = vadd.f32 %v2738, %v2699
      %v2740 = vadd.f32 %v2739, %v2700
      %v2741 = vadd.f32 %v2740, %v2701
      %v2742 = vadd.f32 %v2741, %v2702
      %v2743 = vadd.f32 %v2742, %v2703
      %v2744 = vadd.f32 %v2743, %v2704
      %v2745 = vadd.f32 %v2744, %v2705
      %v2746 = vadd.f32 %v2745, %v2706
      %v2747 = vadd.f32 %v2746, %v2707
      %v2748 = vadd.f32 %v2747, %v2708
      %v2749 = vadd.f32 %v2748, %v2709
      %v2750 = vadd.f32 %v2749, %v2710
      %v2751 = vadd.f32 %v2750, %v2711
      %v2752 = vadd.f32 %v2751, %v2712
      %v2753 = vadd.f32 %v2752, %v2713
      %v2754 = vadd.f32 %v2753, %v2714
      %v2755 = vadd.f32 %v2754, %v2715
      %v2756 = vadd.f32 %v2755, %v2716
      %v2757 = vadd.f32 %v2756, %v2717
      %v2758 = vadd.f32 %v2757, %v2718
      %v2759 = vadd.f32 %v2758, %v2719
      %v2760 = vrot.slane %v2759, 4
      %v2761 = vadd.f32 %v2759, %v2760
      %v2762 = vrot.slane %v2761, 2
      %v2763 = vadd.f32 %v2761, %v2762
      %v2764 = vrot.slane %v2763, 1
      %v2765 = vadd.f32 %v2763, %v2764
      %v2766 = vmul.f32 %v2765, 0.00390625
      %2767 = vst [vmem:[%s195] sm:$0xff] %v2766
      %p2768 = scmp.lt.s32.totalorder %s15, 1
      %s2769 = scalar_select %p2768, %s15, 1
      %s2770 = smul.addr %s2769, 8
      %s2771 = scalar_lea.vmem %s4, %s2770
      // Predicated region
      $region37: #{tv_model_forward.2} parent=35 // pred_check
        %p2772 = pneg %p122
      $region38: #{tv_model_forward.2} parent=35 // pred_check_branch
        %2774 = sbr.rel (%p2772) target = $region40
      $region39: #{tv_model_forward.2} parent=35 // pred_region
        _
      $region40: #{tv_model_forward.2} parent=35 // pred_fallthru
        _
    $region36: #{tv_model_forward.2} parent=5 // pred_fallthru
      _
    %p2775 = scmp.le.s32.totalorder 2, %s10
    // Predicated region
    $region41: #{tv_model_forward.2} parent=5 // pred_check
      %p2776 = pneg %p2775
    $region42: #{tv_model_forward.2} parent=5 // pred_check_branch
      %2778 = sbr.rel (%p2776) target = $region44
    $region43: #{tv_model_forward.2} parent=5 // pred_region
      %s2779 = ssub.s32 %s10, 2
      // Predicated region
      $region45: #{tv_model_forward.2} parent=43 // pred_check
        %p2780 = pneg %p128
      $region46: #{tv_model_forward.2} parent=43 // pred_check_branch
        %2782 = sbr.rel (%p2780) target = $region48
      $region47: #{tv_model_forward.2} parent=43 // pred_region
        %p2783 = scmp.lt.s32.totalorder %s16, 1
        %s2784 = scalar_select %p2783, %s16, 1
        %s2785 = smul.addr %s2784, 8
        %s2786 = scalar_lea.vmem %s4, %s2785
      $region48: #{tv_model_forward.2} parent=43 // pred_fallthru
        _
    $region44: #{tv_model_forward.2} parent=5 // pred_fallthru
      _
  $region6: #{tv_model_forward.2} parent=0 // loop_footer
    %s14 = sadd.s32 1, %s10
  $region7: #{tv_model_forward.2} parent=0 // loop_footer_branch
    %9 = sbr.rel target = $region3
  $region8: #{tv_model_forward.2} parent=0 // loop_exit
    _

</llo_original>
